<compile_context>
chip_gen: v7x
topology: tpu7x:2x2x1
jax: 0.10.0
libtpu: 0.0.40
codegen_flags: <defaults>
</compile_context>

<pallas_src>
import jax
import jax.numpy as jnp
from jax import lax
from jax.experimental import pallas as pl
from jax.experimental.pallas import tpu as pltpu

# ---------------- synthetic backbone config ----------------
CHANNELS = 4
HIDDEN = 32
FEAT_DIM = 32
REQUIRE_CLIP_LEN = 12   # > 0 so the clip-length check of forward() is exercised

_SUB = 8                # frames per in-kernel chunk (8 sublanes -> vreg-resident slabs)


def _pooled_chunk(x_ref, w1_ref, b1_ref, row_start, rows, channels, hw):
    """relu(pointwise conv C->HIDDEN) -> mean over H*W for `rows` frames at `row_start`.

    x_ref : (tile_n, C*HW) VMEM block, HW lane-dense (multiple of 128).
    w1_ref: (C, HIDDEN) in SMEM (scalar splats).
    b1_ref: (HIDDEN,)   in SMEM.
    Returns a (rows, HIDDEN) f32 value.
    """
    # Channel slices: static lane slices of the block -> zero-cost views; each (rows, HW)
    # slab is a couple of vregs at rows=8, so the whole working set is register-resident.
    xs = [x_ref[pl.ds(row_start, rows), c * hw:(c + 1) * hw].astype(jnp.float32)
          for c in range(channels)]
    inv_hw = 1.0 / hw
    cols = []
    for k in range(HIDDEN):
        # Bias folded into the first multiply-add; K=4 contraction stays on the VPU.
        acc = xs[0] * w1_ref[0, k] + b1_ref[k]
        for c in range(1, channels):
            acc = acc + xs[c] * w1_ref[c, k]
        hk = jnp.maximum(acc, 0.0)                                    # ReLU
        cols.append(jnp.sum(hk, axis=-1, keepdims=True) * inv_hw)     # (rows, 1)
    return jnp.concatenate(cols, axis=-1)                             # (rows, HIDDEN)


def _features_kernel(x_ref, w1_ref, b1_ref, w2_ref, b2_ref, o_ref, pooled_ref):
    """Fused per-frame backbone for one tile of frames.

    x_ref     : (tile_n, C*HW) VMEM
    w1_ref    : (C, HIDDEN)    SMEM   pointwise-conv weight
    b1_ref    : (HIDDEN,)      SMEM   pointwise-conv bias
    w2_ref    : (HIDDEN, FEAT_DIM) VMEM projection weight
    b2_ref    : (1, FEAT_DIM)  VMEM   projection bias
    o_ref     : (tile_n, FEAT_DIM) output block
    pooled_ref: (tile_n, HIDDEN) VMEM scratch (pooled features before projection)
    """
    tn = x_ref.shape[0]
    chw = x_ref.shape[1]
    channels = w1_ref.shape[0]
    hw = chw // channels

    full_chunks = tn // _SUB
    rem = tn - full_chunks * _SUB

    def chunk_body(ci, carry):
        r0 = pl.multiple_of(ci * _SUB, _SUB)
        pooled_ref[pl.ds(r0, _SUB), :] = _pooled_chunk(
            x_ref, w1_ref, b1_ref, r0, _SUB, channels, hw)
        return carry

    lax.fori_loop(0, full_chunks, chunk_body, 0)

    if rem:   # static remainder chunk (tile_n not a multiple of 8)
        r0 = full_chunks * _SUB
        pooled_ref[pl.ds(r0, rem), :] = _pooled_chunk(
            x_ref, w1_ref, b1_ref, r0, rem, channels, hw)

    # Tiny projection on the MXU: (tile_n, HIDDEN) @ (HIDDEN, FEAT_DIM).
    out = jnp.dot(pooled_ref[...], w2_ref[...],
                  preferred_element_type=jnp.float32) + b2_ref[...]
    # TODO(synk): if store stalls ever show up at very large N, emit (FEAT_DIM, n)
    # (lane-dense) and transpose in the wrapper; payload is only 128 B/frame today.
    o_ref[...] = out.astype(o_ref.dtype)


def init_params(key):
    k1, k2 = jax.random.split(key)
    w1 = jax.random.normal(k1, (CHANNELS, HIDDEN), jnp.float32) * 0.1
    b1 = jnp.linspace(-0.5, 0.5, HIDDEN, dtype=jnp.float32).reshape(1, HIDDEN)
    w2 = jax.random.normal(k2, (HIDDEN, FEAT_DIM), jnp.float32) * 0.1
    b2 = jnp.linspace(0.0, 1.0, FEAT_DIM, dtype=jnp.float32).reshape(1, FEAT_DIM)
    return w1, b1, w2, b2


def _pick_tile_n(n, tile_n, sub=_SUB):
    """Frames per grid step.

    * Single block when the whole problem fits (no pointless grid steps on 1-TC parts).
    * Otherwise a multiple of `sub` (8), and the step count is nudged to an even number
      so both v7x TensorCores get balanced work under dimension_semantics=("parallel",).
    """
    if n <= tile_n:
        return n
    tn = max(sub, (tile_n // sub) * sub)
    steps = -(-n // tn)
    if steps % 2:
        even_tn = -(-n // (steps + 1))
        even_tn = max(sub, (-(-even_tn // sub)) * sub)
        if (-(-n // even_tn)) % 2 == 0:
            tn = even_tn
    return tn


def extract_features(inputs, params, require_clip_len=REQUIRE_CLIP_LEN, tile_n=512):
    """Mirror of BaseExtractFeatures.forward.

    inputs: (B, T, C, H, W) float32 (same axis convention as the PyTorch module).
    """
    batch_size, true_clip_len, channels, height, width = inputs.shape
    if require_clip_len > 0:
        assert true_clip_len <= require_clip_len, \
            "Expected {}, got {}".format(require_clip_len, true_clip_len)
        # forward() zero-pads the clip dim up to require_clip_len, runs the backbone,
        # then slices back to true_clip_len.  The padded frames' features are discarded,
        # so we never compute them (saves HBM traffic and compute).

    n = batch_size * true_clip_len
    hw = height * width
    # NCHW frame -> (N, C*HW): contiguous reshape (no transpose copy), lane-dense last dim.
    x = inputs.reshape(n, channels * hw)

    w1, b1, w2, b2 = params
    b1k = b1.reshape(HIDDEN)          # SMEM scalar table
    b2k = b2.reshape(1, FEAT_DIM)

    tn = _pick_tile_n(n, tile_n)
    grid = (pl.cdiv(n, tn),)

    # Per-step footprint after the restructure: 2 x input block (tn*4 KiB each) + tiny
    # weights/outputs + (tn, HIDDEN) f32 scratch.  32 MiB is far above need and fits the
    # scoped-VMEM budget on v5e/v6e (128 MiB) and v7x (64 MiB).
    vmem_limit = 32 * 1024 * 1024

    im_feat_flat = pl.pallas_call(
        _features_kernel,
        out_shape=jax.ShapeDtypeStruct((n, FEAT_DIM), jnp.float32),
        grid_spec=pl.GridSpec(
            grid=grid,
            in_specs=[
                pl.BlockSpec((tn, channels * hw), lambda i: (i, 0)),
                pl.BlockSpec(memory_space=pltpu.MemorySpace.SMEM),   # w1 (C, HIDDEN)
                pl.BlockSpec(memory_space=pltpu.MemorySpace.SMEM),   # b1 (HIDDEN,)
                pl.BlockSpec((HIDDEN, FEAT_DIM), lambda i: (0, 0)),  # w2 (resident)
                pl.BlockSpec((1, FEAT_DIM), lambda i: (0, 0)),       # b2 (resident)
            ],
            out_specs=pl.BlockSpec((tn, FEAT_DIM), lambda i: (i, 0)),
            scratch_shapes=[pltpu.VMEM((tn, HIDDEN), jnp.float32)],
        ),
        compiler_params=pltpu.CompilerParams(
            dimension_semantics=("parallel",),
            vmem_limit_bytes=vmem_limit,
        ),
    )(x, w1, b1k, w2, b2k)

    return im_feat_flat.reshape(batch_size, true_clip_len, FEAT_DIM)


def _reference(inputs, params, require_clip_len=REQUIRE_CLIP_LEN):
    """Pure-JAX reference with the literal module semantics (pad -> backbone -> slice)."""
    w1, b1, w2, b2 = params
    b, t_true, c, h, w = inputs.shape
    t = t_true
    if require_clip_len > 0 and t_true < require_clip_len:
        inputs = jnp.pad(inputs, ((0, 0), (0, require_clip_len - t_true),
                                  (0, 0), (0, 0), (0, 0)))
        t = require_clip_len
    xr = inputs.reshape(b * t, c, h * w)                               # (N, C, HW)
    hmid = jnp.maximum(jnp.einsum("ncs,ck->nks", xr, w1)
                       + b1.reshape(1, HIDDEN, 1), 0.0)
    pooled = jnp.mean(hmid, axis=-1)
    feat = (pooled @ w2 + b2).reshape(b, t, FEAT_DIM)
    return feat[:, :t_true, :]


if __name__ == "__main__":
    key = jax.random.PRNGKey(0)
    k_in, k_par = jax.random.split(key)

    # (batch=2, true_clip_len=8, channels=4, height=16, width=16)
    inputs = jax.random.normal(k_in, (2, 8, CHANNELS, 16, 16), jnp.float32)
    params = init_params(k_par)

    out = extract_features(inputs, params)
    out = jax.block_until_ready(out)

    ref = _reference(inputs, params)
    assert out.shape == (2, 8, FEAT_DIM), out.shape
    assert jnp.allclose(out, ref, rtol=1e-5, atol=1e-5), \
        float(jnp.max(jnp.abs(out - ref)))

    print("KERNEL_OK")
</pallas_src>

<mosaic_0001>
module attributes {stable_mosaic.version = 11 : i64} {
  func.func @_features_kernel(%arg0: i32, %arg1: memref<16x1024xf32, #tpu.memory_space<vmem>>, %arg2: memref<4x32xf32, #tpu.memory_space<smem>>, %arg3: memref<32xf32, #tpu.memory_space<smem>>, %arg4: memref<32x32xf32, #tpu.memory_space<vmem>>, %arg5: memref<1x32xf32, #tpu.memory_space<vmem>>, %arg6: memref<16x32xf32, #tpu.memory_space<vmem>>, %arg7: memref<16x32xf32, #tpu.memory_space<vmem>>) attributes {dimension_semantics = [#tpu.dimension_semantics<parallel>], iteration_bounds = array<i64: 1>, scalar_prefetch = 0 : i64, scratch_operands = 1 : i64, tpu.core_type = #tpu.core_type<tc>, window_params = [{transform_indices = @transform_0, window_bounds = array<i64: 16, 1024>}, {transform_indices = @transform_1, window_bounds = array<i64: 4, 32>}, {transform_indices = @transform_2, window_bounds = array<i64: 32>}, {pipeline_mode = #tpu.pipeline_mode<synchronous>, transform_indices = @transform_3, window_bounds = array<i64: 32, 32>}, {pipeline_mode = #tpu.pipeline_mode<synchronous>, transform_indices = @transform_4, window_bounds = array<i64: 1, 32>}, {transform_indices = @transform_5, window_bounds = array<i64: 16, 32>}]} {
    %c0_i32 = arith.constant 0 : i32
    %c2_i32 = arith.constant 2 : i32
    %0 = arith.addi %c0_i32, %c2_i32 : i32
    %c1_i32 = arith.constant 1 : i32
    scf.for %arg8 = %c0_i32 to %0 step %c1_i32  : i32 {
      %c8_i32 = arith.constant 8 : i32
      %8 = arith.muli %arg8, %c8_i32 : i32
      %9 = tpu.assume_multiple %8, 8 : i32
      %10 = arith.index_cast %9 : i32 to index
      %c0_8 = arith.constant 0 : index
      %11 = vector.load %arg1[%10, %c0_8] : memref<16x1024xf32, #tpu.memory_space<vmem>>, vector<8x256xf32>
      %12 = arith.index_cast %9 : i32 to index
      %c256 = arith.constant 256 : index
      %13 = vector.load %arg1[%12, %c256] : memref<16x1024xf32, #tpu.memory_space<vmem>>, vector<8x256xf32>
      %14 = arith.index_cast %9 : i32 to index
      %c512 = arith.constant 512 : index
      %15 = vector.load %arg1[%14, %c512] : memref<16x1024xf32, #tpu.memory_space<vmem>>, vector<8x256xf32>
      %16 = arith.index_cast %9 : i32 to index
      %c768 = arith.constant 768 : index
      %17 = vector.load %arg1[%16, %c768] : memref<16x1024xf32, #tpu.memory_space<vmem>>, vector<8x256xf32>
      %c0_9 = arith.constant 0 : index
      %c0_10 = arith.constant 0 : index
      %18 = memref.load %arg2[%c0_9, %c0_10] : memref<4x32xf32, #tpu.memory_space<smem>>
      %19 = vector.broadcast %18 : f32 to vector<8x256xf32>
      %20 = arith.mulf %11, %19 : vector<8x256xf32>
      %c0_11 = arith.constant 0 : index
      %21 = memref.load %arg3[%c0_11] : memref<32xf32, #tpu.memory_space<smem>>
      %22 = vector.broadcast %21 : f32 to vector<8x256xf32>
      %23 = arith.addf %20, %22 : vector<8x256xf32>
      %c1 = arith.constant 1 : index
      %c0_12 = arith.constant 0 : index
      %24 = memref.load %arg2[%c1, %c0_12] : memref<4x32xf32, #tpu.memory_space<smem>>
      %25 = vector.broadcast %24 : f32 to vector<8x256xf32>
      %26 = arith.mulf %13, %25 : vector<8x256xf32>
      %27 = arith.addf %23, %26 : vector<8x256xf32>
      %c2 = arith.constant 2 : index
      %c0_13 = arith.constant 0 : index
      %28 = memref.load %arg2[%c2, %c0_13] : memref<4x32xf32, #tpu.memory_space<smem>>
      %29 = vector.broadcast %28 : f32 to vector<8x256xf32>
      %30 = arith.mulf %15, %29 : vector<8x256xf32>
      %31 = arith.addf %27, %30 : vector<8x256xf32>
      %c3 = arith.constant 3 : index
      %c0_14 = arith.constant 0 : index
      %32 = memref.load %arg2[%c3, %c0_14] : memref<4x32xf32, #tpu.memory_space<smem>>
      %33 = vector.broadcast %32 : f32 to vector<8x256xf32>
      %34 = arith.mulf %17, %33 : vector<8x256xf32>
      %35 = arith.addf %31, %34 : vector<8x256xf32>
      %cst_15 = arith.constant 0.000000e+00 : f32
      %36 = vector.broadcast %cst_15 : f32 to vector<8x256xf32>
      %37 = arith.maximumf %35, %36 : vector<8x256xf32>
      %cst_16 = arith.constant dense<0.000000e+00> : vector<8xf32>
      %38 = vector.multi_reduction <add>, %37, %cst_16 [1] : vector<8x256xf32> to vector<8xf32>
      %39 = vector.shape_cast %38 : vector<8xf32> to vector<8x1xf32>
      %cst_17 = arith.constant 3.906250e-03 : f32
      %40 = vector.broadcast %cst_17 : f32 to vector<8x1xf32>
      %41 = arith.mulf %39, %40 : vector<8x1xf32>
      %c0_18 = arith.constant 0 : index
      %c1_19 = arith.constant 1 : index
      %42 = memref.load %arg2[%c0_18, %c1_19] : memref<4x32xf32, #tpu.memory_space<smem>>
      %43 = vector.broadcast %42 : f32 to vector<8x256xf32>
      %44 = arith.mulf %11, %43 : vector<8x256xf32>
      %c1_20 = arith.constant 1 : index
      %45 = memref.load %arg3[%c1_20] : memref<32xf32, #tpu.memory_space<smem>>
      %46 = vector.broadcast %45 : f32 to vector<8x256xf32>
      %47 = arith.addf %44, %46 : vector<8x256xf32>
      %c1_21 = arith.constant 1 : index
      %c1_22 = arith.constant 1 : index
      %48 = memref.load %arg2[%c1_21, %c1_22] : memref<4x32xf32, #tpu.memory_space<smem>>
      %49 = vector.broadcast %48 : f32 to vector<8x256xf32>
      %50 = arith.mulf %13, %49 : vector<8x256xf32>
      %51 = arith.addf %47, %50 : vector<8x256xf32>
      %c2_23 = arith.constant 2 : index
      %c1_24 = arith.constant 1 : index
      %52 = memref.load %arg2[%c2_23, %c1_24] : memref<4x32xf32, #tpu.memory_space<smem>>
      %53 = vector.broadcast %52 : f32 to vector<8x256xf32>
      %54 = arith.mulf %15, %53 : vector<8x256xf32>
      %55 = arith.addf %51, %54 : vector<8x256xf32>
      %c3_25 = arith.constant 3 : index
      %c1_26 = arith.constant 1 : index
      %56 = memref.load %arg2[%c3_25, %c1_26] : memref<4x32xf32, #tpu.memory_space<smem>>
      %57 = vector.broadcast %56 : f32 to vector<8x256xf32>
      %58 = arith.mulf %17, %57 : vector<8x256xf32>
      %59 = arith.addf %55, %58 : vector<8x256xf32>
      %cst_27 = arith.constant 0.000000e+00 : f32
      %60 = vector.broadcast %cst_27 : f32 to vector<8x256xf32>
      %61 = arith.maximumf %59, %60 : vector<8x256xf32>
      %cst_28 = arith.constant dense<0.000000e+00> : vector<8xf32>
      %62 = vector.multi_reduction <add>, %61, %cst_28 [1] : vector<8x256xf32> to vector<8xf32>
      %63 = vector.shape_cast %62 : vector<8xf32> to vector<8x1xf32>
      %cst_29 = arith.constant 3.906250e-03 : f32
      %64 = vector.broadcast %cst_29 : f32 to vector<8x1xf32>
      %65 = arith.mulf %63, %64 : vector<8x1xf32>
      %c0_30 = arith.constant 0 : index
      %c2_31 = arith.constant 2 : index
      %66 = memref.load %arg2[%c0_30, %c2_31] : memref<4x32xf32, #tpu.memory_space<smem>>
      %67 = vector.broadcast %66 : f32 to vector<8x256xf32>
      %68 = arith.mulf %11, %67 : vector<8x256xf32>
      %c2_32 = arith.constant 2 : index
      %69 = memref.load %arg3[%c2_32] : memref<32xf32, #tpu.memory_space<smem>>
      %70 = vector.broadcast %69 : f32 to vector<8x256xf32>
      %71 = arith.addf %68, %70 : vector<8x256xf32>
      %c1_33 = arith.constant 1 : index
      %c2_34 = arith.constant 2 : index
      %72 = memref.load %arg2[%c1_33, %c2_34] : memref<4x32xf32, #tpu.memory_space<smem>>
      %73 = vector.broadcast %72 : f32 to vector<8x256xf32>
      %74 = arith.mulf %13, %73 : vector<8x256xf32>
      %75 = arith.addf %71, %74 : vector<8x256xf32>
      %c2_35 = arith.constant 2 : index
      %c2_36 = arith.constant 2 : index
      %76 = memref.load %arg2[%c2_35, %c2_36] : memref<4x32xf32, #tpu.memory_space<smem>>
      %77 = vector.broadcast %76 : f32 to vector<8x256xf32>
      %78 = arith.mulf %15, %77 : vector<8x256xf32>
      %79 = arith.addf %75, %78 : vector<8x256xf32>
      %c3_37 = arith.constant 3 : index
      %c2_38 = arith.constant 2 : index
      %80 = memref.load %arg2[%c3_37, %c2_38] : memref<4x32xf32, #tpu.memory_space<smem>>
      %81 = vector.broadcast %80 : f32 to vector<8x256xf32>
      %82 = arith.mulf %17, %81 : vector<8x256xf32>
      %83 = arith.addf %79, %82 : vector<8x256xf32>
      %cst_39 = arith.constant 0.000000e+00 : f32
      %84 = vector.broadcast %cst_39 : f32 to vector<8x256xf32>
      %85 = arith.maximumf %83, %84 : vector<8x256xf32>
      %cst_40 = arith.constant dense<0.000000e+00> : vector<8xf32>
      %86 = vector.multi_reduction <add>, %85, %cst_40 [1] : vector<8x256xf32> to vector<8xf32>
      %87 = vector.shape_cast %86 : vector<8xf32> to vector<8x1xf32>
      %cst_41 = arith.constant 3.906250e-03 : f32
      %88 = vector.broadcast %cst_41 : f32 to vector<8x1xf32>
      %89 = arith.mulf %87, %88 : vector<8x1xf32>
      %c0_42 = arith.constant 0 : index
      %c3_43 = arith.constant 3 : index
      %90 = memref.load %arg2[%c0_42, %c3_43] : memref<4x32xf32, #tpu.memory_space<smem>>
      %91 = vector.broadcast %90 : f32 to vector<8x256xf32>
      %92 = arith.mulf %11, %91 : vector<8x256xf32>
      %c3_44 = arith.constant 3 : index
      %93 = memref.load %arg3[%c3_44] : memref<32xf32, #tpu.memory_space<smem>>
      %94 = vector.broadcast %93 : f32 to vector<8x256xf32>
      %95 = arith.addf %92, %94 : vector<8x256xf32>
      %c1_45 = arith.constant 1 : index
      %c3_46 = arith.constant 3 : index
      %96 = memref.load %arg2[%c1_45, %c3_46] : memref<4x32xf32, #tpu.memory_space<smem>>
      %97 = vector.broadcast %96 : f32 to vector<8x256xf32>
      %98 = arith.mulf %13, %97 : vector<8x256xf32>
      %99 = arith.addf %95, %98 : vector<8x256xf32>
      %c2_47 = arith.constant 2 : index
      %c3_48 = arith.constant 3 : index
      %100 = memref.load %arg2[%c2_47, %c3_48] : memref<4x32xf32, #tpu.memory_space<smem>>
      %101 = vector.broadcast %100 : f32 to vector<8x256xf32>
      %102 = arith.mulf %15, %101 : vector<8x256xf32>
      %103 = arith.addf %99, %102 : vector<8x256xf32>
      %c3_49 = arith.constant 3 : index
      %c3_50 = arith.constant 3 : index
      %104 = memref.load %arg2[%c3_49, %c3_50] : memref<4x32xf32, #tpu.memory_space<smem>>
      %105 = vector.broadcast %104 : f32 to vector<8x256xf32>
      %106 = arith.mulf %17, %105 : vector<8x256xf32>
      %107 = arith.addf %103, %106 : vector<8x256xf32>
      %cst_51 = arith.constant 0.000000e+00 : f32
      %108 = vector.broadcast %cst_51 : f32 to vector<8x256xf32>
      %109 = arith.maximumf %107, %108 : vector<8x256xf32>
      %cst_52 = arith.constant dense<0.000000e+00> : vector<8xf32>
      %110 = vector.multi_reduction <add>, %109, %cst_52 [1] : vector<8x256xf32> to vector<8xf32>
      %111 = vector.shape_cast %110 : vector<8xf32> to vector<8x1xf32>
      %cst_53 = arith.constant 3.906250e-03 : f32
      %112 = vector.broadcast %cst_53 : f32 to vector<8x1xf32>
      %113 = arith.mulf %111, %112 : vector<8x1xf32>
      %c0_54 = arith.constant 0 : index
      %c4 = arith.constant 4 : index
      %114 = memref.load %arg2[%c0_54, %c4] : memref<4x32xf32, #tpu.memory_space<smem>>
      %115 = vector.broadcast %114 : f32 to vector<8x256xf32>
      %116 = arith.mulf %11, %115 : vector<8x256xf32>
      %c4_55 = arith.constant 4 : index
      %117 = memref.load %arg3[%c4_55] : memref<32xf32, #tpu.memory_space<smem>>
      %118 = vector.broadcast %117 : f32 to vector<8x256xf32>
      %119 = arith.addf %116, %118 : vector<8x256xf32>
      %c1_56 = arith.constant 1 : index
      %c4_57 = arith.constant 4 : index
      %120 = memref.load %arg2[%c1_56, %c4_57] : memref<4x32xf32, #tpu.memory_space<smem>>
      %121 = vector.broadcast %120 : f32 to vector<8x256xf32>
      %122 = arith.mulf %13, %121 : vector<8x256xf32>
      %123 = arith.addf %119, %122 : vector<8x256xf32>
      %c2_58 = arith.constant 2 : index
      %c4_59 = arith.constant 4 : index
      %124 = memref.load %arg2[%c2_58, %c4_59] : memref<4x32xf32, #tpu.memory_space<smem>>
      %125 = vector.broadcast %124 : f32 to vector<8x256xf32>
      %126 = arith.mulf %15, %125 : vector<8x256xf32>
      %127 = arith.addf %123, %126 : vector<8x256xf32>
      %c3_60 = arith.constant 3 : index
      %c4_61 = arith.constant 4 : index
      %128 = memref.load %arg2[%c3_60, %c4_61] : memref<4x32xf32, #tpu.memory_space<smem>>
      %129 = vector.broadcast %128 : f32 to vector<8x256xf32>
      %130 = arith.mulf %17, %129 : vector<8x256xf32>
      %131 = arith.addf %127, %130 : vector<8x256xf32>
      %cst_62 = arith.constant 0.000000e+00 : f32
      %132 = vector.broadcast %cst_62 : f32 to vector<8x256xf32>
      %133 = arith.maximumf %131, %132 : vector<8x256xf32>
      %cst_63 = arith.constant dense<0.000000e+00> : vector<8xf32>
      %134 = vector.multi_reduction <add>, %133, %cst_63 [1] : vector<8x256xf32> to vector<8xf32>
      %135 = vector.shape_cast %134 : vector<8xf32> to vector<8x1xf32>
      %cst_64 = arith.constant 3.906250e-03 : f32
      %136 = vector.broadcast %cst_64 : f32 to vector<8x1xf32>
      %137 = arith.mulf %135, %136 : vector<8x1xf32>
      %c0_65 = arith.constant 0 : index
      %c5 = arith.constant 5 : index
      %138 = memref.load %arg2[%c0_65, %c5] : memref<4x32xf32, #tpu.memory_space<smem>>
      %139 = vector.broadcast %138 : f32 to vector<8x256xf32>
      %140 = arith.mulf %11, %139 : vector<8x256xf32>
      %c5_66 = arith.constant 5 : index
      %141 = memref.load %arg3[%c5_66] : memref<32xf32, #tpu.memory_space<smem>>
      %142 = vector.broadcast %141 : f32 to vector<8x256xf32>
      %143 = arith.addf %140, %142 : vector<8x256xf32>
      %c1_67 = arith.constant 1 : index
      %c5_68 = arith.constant 5 : index
      %144 = memref.load %arg2[%c1_67, %c5_68] : memref<4x32xf32, #tpu.memory_space<smem>>
      %145 = vector.broadcast %144 : f32 to vector<8x256xf32>
      %146 = arith.mulf %13, %145 : vector<8x256xf32>
      %147 = arith.addf %143, %146 : vector<8x256xf32>
      %c2_69 = arith.constant 2 : index
      %c5_70 = arith.constant 5 : index
      %148 = memref.load %arg2[%c2_69, %c5_70] : memref<4x32xf32, #tpu.memory_space<smem>>
      %149 = vector.broadcast %148 : f32 to vector<8x256xf32>
      %150 = arith.mulf %15, %149 : vector<8x256xf32>
      %151 = arith.addf %147, %150 : vector<8x256xf32>
      %c3_71 = arith.constant 3 : index
      %c5_72 = arith.constant 5 : index
      %152 = memref.load %arg2[%c3_71, %c5_72] : memref<4x32xf32, #tpu.memory_space<smem>>
      %153 = vector.broadcast %152 : f32 to vector<8x256xf32>
      %154 = arith.mulf %17, %153 : vector<8x256xf32>
      %155 = arith.addf %151, %154 : vector<8x256xf32>
      %cst_73 = arith.constant 0.000000e+00 : f32
      %156 = vector.broadcast %cst_73 : f32 to vector<8x256xf32>
      %157 = arith.maximumf %155, %156 : vector<8x256xf32>
      %cst_74 = arith.constant dense<0.000000e+00> : vector<8xf32>
      %158 = vector.multi_reduction <add>, %157, %cst_74 [1] : vector<8x256xf32> to vector<8xf32>
      %159 = vector.shape_cast %158 : vector<8xf32> to vector<8x1xf32>
      %cst_75 = arith.constant 3.906250e-03 : f32
      %160 = vector.broadcast %cst_75 : f32 to vector<8x1xf32>
      %161 = arith.mulf %159, %160 : vector<8x1xf32>
      %c0_76 = arith.constant 0 : index
      %c6 = arith.constant 6 : index
      %162 = memref.load %arg2[%c0_76, %c6] : memref<4x32xf32, #tpu.memory_space<smem>>
      %163 = vector.broadcast %162 : f32 to vector<8x256xf32>
      %164 = arith.mulf %11, %163 : vector<8x256xf32>
      %c6_77 = arith.constant 6 : index
      %165 = memref.load %arg3[%c6_77] : memref<32xf32, #tpu.memory_space<smem>>
      %166 = vector.broadcast %165 : f32 to vector<8x256xf32>
      %167 = arith.addf %164, %166 : vector<8x256xf32>
      %c1_78 = arith.constant 1 : index
      %c6_79 = arith.constant 6 : index
      %168 = memref.load %arg2[%c1_78, %c6_79] : memref<4x32xf32, #tpu.memory_space<smem>>
      %169 = vector.broadcast %168 : f32 to vector<8x256xf32>
      %170 = arith.mulf %13, %169 : vector<8x256xf32>
      %171 = arith.addf %167, %170 : vector<8x256xf32>
      %c2_80 = arith.constant 2 : index
      %c6_81 = arith.constant 6 : index
      %172 = memref.load %arg2[%c2_80, %c6_81] : memref<4x32xf32, #tpu.memory_space<smem>>
      %173 = vector.broadcast %172 : f32 to vector<8x256xf32>
      %174 = arith.mulf %15, %173 : vector<8x256xf32>
      %175 = arith.addf %171, %174 : vector<8x256xf32>
      %c3_82 = arith.constant 3 : index
      %c6_83 = arith.constant 6 : index
      %176 = memref.load %arg2[%c3_82, %c6_83] : memref<4x32xf32, #tpu.memory_space<smem>>
      %177 = vector.broadcast %176 : f32 to vector<8x256xf32>
      %178 = arith.mulf %17, %177 : vector<8x256xf32>
      %179 = arith.addf %175, %178 : vector<8x256xf32>
      %cst_84 = arith.constant 0.000000e+00 : f32
      %180 = vector.broadcast %cst_84 : f32 to vector<8x256xf32>
      %181 = arith.maximumf %179, %180 : vector<8x256xf32>
      %cst_85 = arith.constant dense<0.000000e+00> : vector<8xf32>
      %182 = vector.multi_reduction <add>, %181, %cst_85 [1] : vector<8x256xf32> to vector<8xf32>
      %183 = vector.shape_cast %182 : vector<8xf32> to vector<8x1xf32>
      %cst_86 = arith.constant 3.906250e-03 : f32
      %184 = vector.broadcast %cst_86 : f32 to vector<8x1xf32>
      %185 = arith.mulf %183, %184 : vector<8x1xf32>
      %c0_87 = arith.constant 0 : index
      %c7 = arith.constant 7 : index
      %186 = memref.load %arg2[%c0_87, %c7] : memref<4x32xf32, #tpu.memory_space<smem>>
      %187 = vector.broadcast %186 : f32 to vector<8x256xf32>
      %188 = arith.mulf %11, %187 : vector<8x256xf32>
      %c7_88 = arith.constant 7 : index
      %189 = memref.load %arg3[%c7_88] : memref<32xf32, #tpu.memory_space<smem>>
      %190 = vector.broadcast %189 : f32 to vector<8x256xf32>
      %191 = arith.addf %188, %190 : vector<8x256xf32>
      %c1_89 = arith.constant 1 : index
      %c7_90 = arith.constant 7 : index
      %192 = memref.load %arg2[%c1_89, %c7_90] : memref<4x32xf32, #tpu.memory_space<smem>>
      %193 = vector.broadcast %192 : f32 to vector<8x256xf32>
      %194 = arith.mulf %13, %193 : vector<8x256xf32>
      %195 = arith.addf %191, %194 : vector<8x256xf32>
      %c2_91 = arith.constant 2 : index
      %c7_92 = arith.constant 7 : index
      %196 = memref.load %arg2[%c2_91, %c7_92] : memref<4x32xf32, #tpu.memory_space<smem>>
      %197 = vector.broadcast %196 : f32 to vector<8x256xf32>
      %198 = arith.mulf %15, %197 : vector<8x256xf32>
      %199 = arith.addf %195, %198 : vector<8x256xf32>
      %c3_93 = arith.constant 3 : index
      %c7_94 = arith.constant 7 : index
      %200 = memref.load %arg2[%c3_93, %c7_94] : memref<4x32xf32, #tpu.memory_space<smem>>
      %201 = vector.broadcast %200 : f32 to vector<8x256xf32>
      %202 = arith.mulf %17, %201 : vector<8x256xf32>
      %203 = arith.addf %199, %202 : vector<8x256xf32>
      %cst_95 = arith.constant 0.000000e+00 : f32
      %204 = vector.broadcast %cst_95 : f32 to vector<8x256xf32>
      %205 = arith.maximumf %203, %204 : vector<8x256xf32>
      %cst_96 = arith.constant dense<0.000000e+00> : vector<8xf32>
      %206 = vector.multi_reduction <add>, %205, %cst_96 [1] : vector<8x256xf32> to vector<8xf32>
      %207 = vector.shape_cast %206 : vector<8xf32> to vector<8x1xf32>
      %cst_97 = arith.constant 3.906250e-03 : f32
      %208 = vector.broadcast %cst_97 : f32 to vector<8x1xf32>
      %209 = arith.mulf %207, %208 : vector<8x1xf32>
      %c0_98 = arith.constant 0 : index
      %c8 = arith.constant 8 : index
      %210 = memref.load %arg2[%c0_98, %c8] : memref<4x32xf32, #tpu.memory_space<smem>>
      %211 = vector.broadcast %210 : f32 to vector<8x256xf32>
      %212 = arith.mulf %11, %211 : vector<8x256xf32>
      %c8_99 = arith.constant 8 : index
      %213 = memref.load %arg3[%c8_99] : memref<32xf32, #tpu.memory_space<smem>>
      %214 = vector.broadcast %213 : f32 to vector<8x256xf32>
      %215 = arith.addf %212, %214 : vector<8x256xf32>
      %c1_100 = arith.constant 1 : index
      %c8_101 = arith.constant 8 : index
      %216 = memref.load %arg2[%c1_100, %c8_101] : memref<4x32xf32, #tpu.memory_space<smem>>
      %217 = vector.broadcast %216 : f32 to vector<8x256xf32>
      %218 = arith.mulf %13, %217 : vector<8x256xf32>
      %219 = arith.addf %215, %218 : vector<8x256xf32>
      %c2_102 = arith.constant 2 : index
      %c8_103 = arith.constant 8 : index
      %220 = memref.load %arg2[%c2_102, %c8_103] : memref<4x32xf32, #tpu.memory_space<smem>>
      %221 = vector.broadcast %220 : f32 to vector<8x256xf32>
      %222 = arith.mulf %15, %221 : vector<8x256xf32>
      %223 = arith.addf %219, %222 : vector<8x256xf32>
      %c3_104 = arith.constant 3 : index
      %c8_105 = arith.constant 8 : index
      %224 = memref.load %arg2[%c3_104, %c8_105] : memref<4x32xf32, #tpu.memory_space<smem>>
      %225 = vector.broadcast %224 : f32 to vector<8x256xf32>
      %226 = arith.mulf %17, %225 : vector<8x256xf32>
      %227 = arith.addf %223, %226 : vector<8x256xf32>
      %cst_106 = arith.constant 0.000000e+00 : f32
      %228 = vector.broadcast %cst_106 : f32 to vector<8x256xf32>
      %229 = arith.maximumf %227, %228 : vector<8x256xf32>
      %cst_107 = arith.constant dense<0.000000e+00> : vector<8xf32>
      %230 = vector.multi_reduction <add>, %229, %cst_107 [1] : vector<8x256xf32> to vector<8xf32>
      %231 = vector.shape_cast %230 : vector<8xf32> to vector<8x1xf32>
      %cst_108 = arith.constant 3.906250e-03 : f32
      %232 = vector.broadcast %cst_108 : f32 to vector<8x1xf32>
      %233 = arith.mulf %231, %232 : vector<8x1xf32>
      %c0_109 = arith.constant 0 : index
      %c9 = arith.constant 9 : index
      %234 = memref.load %arg2[%c0_109, %c9] : memref<4x32xf32, #tpu.memory_space<smem>>
      %235 = vector.broadcast %234 : f32 to vector<8x256xf32>
      %236 = arith.mulf %11, %235 : vector<8x256xf32>
      %c9_110 = arith.constant 9 : index
      %237 = memref.load %arg3[%c9_110] : memref<32xf32, #tpu.memory_space<smem>>
      %238 = vector.broadcast %237 : f32 to vector<8x256xf32>
      %239 = arith.addf %236, %238 : vector<8x256xf32>
      %c1_111 = arith.constant 1 : index
      %c9_112 = arith.constant 9 : index
      %240 = memref.load %arg2[%c1_111, %c9_112] : memref<4x32xf32, #tpu.memory_space<smem>>
      %241 = vector.broadcast %240 : f32 to vector<8x256xf32>
      %242 = arith.mulf %13, %241 : vector<8x256xf32>
      %243 = arith.addf %239, %242 : vector<8x256xf32>
      %c2_113 = arith.constant 2 : index
      %c9_114 = arith.constant 9 : index
      %244 = memref.load %arg2[%c2_113, %c9_114] : memref<4x32xf32, #tpu.memory_space<smem>>
      %245 = vector.broadcast %244 : f32 to vector<8x256xf32>
      %246 = arith.mulf %15, %245 : vector<8x256xf32>
      %247 = arith.addf %243, %246 : vector<8x256xf32>
      %c3_115 = arith.constant 3 : index
      %c9_116 = arith.constant 9 : index
      %248 = memref.load %arg2[%c3_115, %c9_116] : memref<4x32xf32, #tpu.memory_space<smem>>
      %249 = vector.broadcast %248 : f32 to vector<8x256xf32>
      %250 = arith.mulf %17, %249 : vector<8x256xf32>
      %251 = arith.addf %247, %250 : vector<8x256xf32>
      %cst_117 = arith.constant 0.000000e+00 : f32
      %252 = vector.broadcast %cst_117 : f32 to vector<8x256xf32>
      %253 = arith.maximumf %251, %252 : vector<8x256xf32>
      %cst_118 = arith.constant dense<0.000000e+00> : vector<8xf32>
      %254 = vector.multi_reduction <add>, %253, %cst_118 [1] : vector<8x256xf32> to vector<8xf32>
      %255 = vector.shape_cast %254 : vector<8xf32> to vector<8x1xf32>
      %cst_119 = arith.constant 3.906250e-03 : f32
      %256 = vector.broadcast %cst_119 : f32 to vector<8x1xf32>
      %257 = arith.mulf %255, %256 : vector<8x1xf32>
      %c0_120 = arith.constant 0 : index
      %c10 = arith.constant 10 : index
      %258 = memref.load %arg2[%c0_120, %c10] : memref<4x32xf32, #tpu.memory_space<smem>>
      %259 = vector.broadcast %258 : f32 to vector<8x256xf32>
      %260 = arith.mulf %11, %259 : vector<8x256xf32>
      %c10_121 = arith.constant 10 : index
      %261 = memref.load %arg3[%c10_121] : memref<32xf32, #tpu.memory_space<smem>>
      %262 = vector.broadcast %261 : f32 to vector<8x256xf32>
      %263 = arith.addf %260, %262 : vector<8x256xf32>
      %c1_122 = arith.constant 1 : index
      %c10_123 = arith.constant 10 : index
      %264 = memref.load %arg2[%c1_122, %c10_123] : memref<4x32xf32, #tpu.memory_space<smem>>
      %265 = vector.broadcast %264 : f32 to vector<8x256xf32>
      %266 = arith.mulf %13, %265 : vector<8x256xf32>
      %267 = arith.addf %263, %266 : vector<8x256xf32>
      %c2_124 = arith.constant 2 : index
      %c10_125 = arith.constant 10 : index
      %268 = memref.load %arg2[%c2_124, %c10_125] : memref<4x32xf32, #tpu.memory_space<smem>>
      %269 = vector.broadcast %268 : f32 to vector<8x256xf32>
      %270 = arith.mulf %15, %269 : vector<8x256xf32>
      %271 = arith.addf %267, %270 : vector<8x256xf32>
      %c3_126 = arith.constant 3 : index
      %c10_127 = arith.constant 10 : index
      %272 = memref.load %arg2[%c3_126, %c10_127] : memref<4x32xf32, #tpu.memory_space<smem>>
      %273 = vector.broadcast %272 : f32 to vector<8x256xf32>
      %274 = arith.mulf %17, %273 : vector<8x256xf32>
      %275 = arith.addf %271, %274 : vector<8x256xf32>
      %cst_128 = arith.constant 0.000000e+00 : f32
      %276 = vector.broadcast %cst_128 : f32 to vector<8x256xf32>
      %277 = arith.maximumf %275, %276 : vector<8x256xf32>
      %cst_129 = arith.constant dense<0.000000e+00> : vector<8xf32>
      %278 = vector.multi_reduction <add>, %277, %cst_129 [1] : vector<8x256xf32> to vector<8xf32>
      %279 = vector.shape_cast %278 : vector<8xf32> to vector<8x1xf32>
      %cst_130 = arith.constant 3.906250e-03 : f32
      %280 = vector.broadcast %cst_130 : f32 to vector<8x1xf32>
      %281 = arith.mulf %279, %280 : vector<8x1xf32>
      %c0_131 = arith.constant 0 : index
      %c11 = arith.constant 11 : index
      %282 = memref.load %arg2[%c0_131, %c11] : memref<4x32xf32, #tpu.memory_space<smem>>
      %283 = vector.broadcast %282 : f32 to vector<8x256xf32>
      %284 = arith.mulf %11, %283 : vector<8x256xf32>
      %c11_132 = arith.constant 11 : index
      %285 = memref.load %arg3[%c11_132] : memref<32xf32, #tpu.memory_space<smem>>
      %286 = vector.broadcast %285 : f32 to vector<8x256xf32>
      %287 = arith.addf %284, %286 : vector<8x256xf32>
      %c1_133 = arith.constant 1 : index
      %c11_134 = arith.constant 11 : index
      %288 = memref.load %arg2[%c1_133, %c11_134] : memref<4x32xf32, #tpu.memory_space<smem>>
      %289 = vector.broadcast %288 : f32 to vector<8x256xf32>
      %290 = arith.mulf %13, %289 : vector<8x256xf32>
      %291 = arith.addf %287, %290 : vector<8x256xf32>
      %c2_135 = arith.constant 2 : index
      %c11_136 = arith.constant 11 : index
      %292 = memref.load %arg2[%c2_135, %c11_136] : memref<4x32xf32, #tpu.memory_space<smem>>
      %293 = vector.broadcast %292 : f32 to vector<8x256xf32>
      %294 = arith.mulf %15, %293 : vector<8x256xf32>
      %295 = arith.addf %291, %294 : vector<8x256xf32>
      %c3_137 = arith.constant 3 : index
      %c11_138 = arith.constant 11 : index
      %296 = memref.load %arg2[%c3_137, %c11_138] : memref<4x32xf32, #tpu.memory_space<smem>>
      %297 = vector.broadcast %296 : f32 to vector<8x256xf32>
      %298 = arith.mulf %17, %297 : vector<8x256xf32>
      %299 = arith.addf %295, %298 : vector<8x256xf32>
      %cst_139 = arith.constant 0.000000e+00 : f32
      %300 = vector.broadcast %cst_139 : f32 to vector<8x256xf32>
      %301 = arith.maximumf %299, %300 : vector<8x256xf32>
      %cst_140 = arith.constant dense<0.000000e+00> : vector<8xf32>
      %302 = vector.multi_reduction <add>, %301, %cst_140 [1] : vector<8x256xf32> to vector<8xf32>
      %303 = vector.shape_cast %302 : vector<8xf32> to vector<8x1xf32>
      %cst_141 = arith.constant 3.906250e-03 : f32
      %304 = vector.broadcast %cst_141 : f32 to vector<8x1xf32>
      %305 = arith.mulf %303, %304 : vector<8x1xf32>
      %c0_142 = arith.constant 0 : index
      %c12 = arith.constant 12 : index
      %306 = memref.load %arg2[%c0_142, %c12] : memref<4x32xf32, #tpu.memory_space<smem>>
      %307 = vector.broadcast %306 : f32 to vector<8x256xf32>
      %308 = arith.mulf %11, %307 : vector<8x256xf32>
      %c12_143 = arith.constant 12 : index
      %309 = memref.load %arg3[%c12_143] : memref<32xf32, #tpu.memory_space<smem>>
      %310 = vector.broadcast %309 : f32 to vector<8x256xf32>
      %311 = arith.addf %308, %310 : vector<8x256xf32>
      %c1_144 = arith.constant 1 : index
      %c12_145 = arith.constant 12 : index
      %312 = memref.load %arg2[%c1_144, %c12_145] : memref<4x32xf32, #tpu.memory_space<smem>>
      %313 = vector.broadcast %312 : f32 to vector<8x256xf32>
      %314 = arith.mulf %13, %313 : vector<8x256xf32>
      %315 = arith.addf %311, %314 : vector<8x256xf32>
      %c2_146 = arith.constant 2 : index
      %c12_147 = arith.constant 12 : index
      %316 = memref.load %arg2[%c2_146, %c12_147] : memref<4x32xf32, #tpu.memory_space<smem>>
      %317 = vector.broadcast %316 : f32 to vector<8x256xf32>
      %318 = arith.mulf %15, %317 : vector<8x256xf32>
      %319 = arith.addf %315, %318 : vector<8x256xf32>
      %c3_148 = arith.constant 3 : index
      %c12_149 = arith.constant 12 : index
      %320 = memref.load %arg2[%c3_148, %c12_149] : memref<4x32xf32, #tpu.memory_space<smem>>
      %321 = vector.broadcast %320 : f32 to vector<8x256xf32>
      %322 = arith.mulf %17, %321 : vector<8x256xf32>
      %323 = arith.addf %319, %322 : vector<8x256xf32>
      %cst_150 = arith.constant 0.000000e+00 : f32
      %324 = vector.broadcast %cst_150 : f32 to vector<8x256xf32>
      %325 = arith.maximumf %323, %324 : vector<8x256xf32>
      %cst_151 = arith.constant dense<0.000000e+00> : vector<8xf32>
      %326 = vector.multi_reduction <add>, %325, %cst_151 [1] : vector<8x256xf32> to vector<8xf32>
      %327 = vector.shape_cast %326 : vector<8xf32> to vector<8x1xf32>
      %cst_152 = arith.constant 3.906250e-03 : f32
      %328 = vector.broadcast %cst_152 : f32 to vector<8x1xf32>
      %329 = arith.mulf %327, %328 : vector<8x1xf32>
      %c0_153 = arith.constant 0 : index
      %c13 = arith.constant 13 : index
      %330 = memref.load %arg2[%c0_153, %c13] : memref<4x32xf32, #tpu.memory_space<smem>>
      %331 = vector.broadcast %330 : f32 to vector<8x256xf32>
      %332 = arith.mulf %11, %331 : vector<8x256xf32>
      %c13_154 = arith.constant 13 : index
      %333 = memref.load %arg3[%c13_154] : memref<32xf32, #tpu.memory_space<smem>>
      %334 = vector.broadcast %333 : f32 to vector<8x256xf32>
      %335 = arith.addf %332, %334 : vector<8x256xf32>
      %c1_155 = arith.constant 1 : index
      %c13_156 = arith.constant 13 : index
      %336 = memref.load %arg2[%c1_155, %c13_156] : memref<4x32xf32, #tpu.memory_space<smem>>
      %337 = vector.broadcast %336 : f32 to vector<8x256xf32>
      %338 = arith.mulf %13, %337 : vector<8x256xf32>
      %339 = arith.addf %335, %338 : vector<8x256xf32>
      %c2_157 = arith.constant 2 : index
      %c13_158 = arith.constant 13 : index
      %340 = memref.load %arg2[%c2_157, %c13_158] : memref<4x32xf32, #tpu.memory_space<smem>>
      %341 = vector.broadcast %340 : f32 to vector<8x256xf32>
      %342 = arith.mulf %15, %341 : vector<8x256xf32>
      %343 = arith.addf %339, %342 : vector<8x256xf32>
      %c3_159 = arith.constant 3 : index
      %c13_160 = arith.constant 13 : index
      %344 = memref.load %arg2[%c3_159, %c13_160] : memref<4x32xf32, #tpu.memory_space<smem>>
      %345 = vector.broadcast %344 : f32 to vector<8x256xf32>
      %346 = arith.mulf %17, %345 : vector<8x256xf32>
      %347 = arith.addf %343, %346 : vector<8x256xf32>
      %cst_161 = arith.constant 0.000000e+00 : f32
      %348 = vector.broadcast %cst_161 : f32 to vector<8x256xf32>
      %349 = arith.maximumf %347, %348 : vector<8x256xf32>
      %cst_162 = arith.constant dense<0.000000e+00> : vector<8xf32>
      %350 = vector.multi_reduction <add>, %349, %cst_162 [1] : vector<8x256xf32> to vector<8xf32>
      %351 = vector.shape_cast %350 : vector<8xf32> to vector<8x1xf32>
      %cst_163 = arith.constant 3.906250e-03 : f32
      %352 = vector.broadcast %cst_163 : f32 to vector<8x1xf32>
      %353 = arith.mulf %351, %352 : vector<8x1xf32>
      %c0_164 = arith.constant 0 : index
      %c14 = arith.constant 14 : index
      %354 = memref.load %arg2[%c0_164, %c14] : memref<4x32xf32, #tpu.memory_space<smem>>
      %355 = vector.broadcast %354 : f32 to vector<8x256xf32>
      %356 = arith.mulf %11, %355 : vector<8x256xf32>
      %c14_165 = arith.constant 14 : index
      %357 = memref.load %arg3[%c14_165] : memref<32xf32, #tpu.memory_space<smem>>
      %358 = vector.broadcast %357 : f32 to vector<8x256xf32>
      %359 = arith.addf %356, %358 : vector<8x256xf32>
      %c1_166 = arith.constant 1 : index
      %c14_167 = arith.constant 14 : index
      %360 = memref.load %arg2[%c1_166, %c14_167] : memref<4x32xf32, #tpu.memory_space<smem>>
      %361 = vector.broadcast %360 : f32 to vector<8x256xf32>
      %362 = arith.mulf %13, %361 : vector<8x256xf32>
      %363 = arith.addf %359, %362 : vector<8x256xf32>
      %c2_168 = arith.constant 2 : index
      %c14_169 = arith.constant 14 : index
      %364 = memref.load %arg2[%c2_168, %c14_169] : memref<4x32xf32, #tpu.memory_space<smem>>
      %365 = vector.broadcast %364 : f32 to vector<8x256xf32>
      %366 = arith.mulf %15, %365 : vector<8x256xf32>
      %367 = arith.addf %363, %366 : vector<8x256xf32>
      %c3_170 = arith.constant 3 : index
      %c14_171 = arith.constant 14 : index
      %368 = memref.load %arg2[%c3_170, %c14_171] : memref<4x32xf32, #tpu.memory_space<smem>>
      %369 = vector.broadcast %368 : f32 to vector<8x256xf32>
      %370 = arith.mulf %17, %369 : vector<8x256xf32>
      %371 = arith.addf %367, %370 : vector<8x256xf32>
      %cst_172 = arith.constant 0.000000e+00 : f32
      %372 = vector.broadcast %cst_172 : f32 to vector<8x256xf32>
      %373 = arith.maximumf %371, %372 : vector<8x256xf32>
      %cst_173 = arith.constant dense<0.000000e+00> : vector<8xf32>
      %374 = vector.multi_reduction <add>, %373, %cst_173 [1] : vector<8x256xf32> to vector<8xf32>
      %375 = vector.shape_cast %374 : vector<8xf32> to vector<8x1xf32>
      %cst_174 = arith.constant 3.906250e-03 : f32
      %376 = vector.broadcast %cst_174 : f32 to vector<8x1xf32>
      %377 = arith.mulf %375, %376 : vector<8x1xf32>
      %c0_175 = arith.constant 0 : index
      %c15 = arith.constant 15 : index
      %378 = memref.load %arg2[%c0_175, %c15] : memref<4x32xf32, #tpu.memory_space<smem>>
      %379 = vector.broadcast %378 : f32 to vector<8x256xf32>
      %380 = arith.mulf %11, %379 : vector<8x256xf32>
      %c15_176 = arith.constant 15 : index
      %381 = memref.load %arg3[%c15_176] : memref<32xf32, #tpu.memory_space<smem>>
      %382 = vector.broadcast %381 : f32 to vector<8x256xf32>
      %383 = arith.addf %380, %382 : vector<8x256xf32>
      %c1_177 = arith.constant 1 : index
      %c15_178 = arith.constant 15 : index
      %384 = memref.load %arg2[%c1_177, %c15_178] : memref<4x32xf32, #tpu.memory_space<smem>>
      %385 = vector.broadcast %384 : f32 to vector<8x256xf32>
      %386 = arith.mulf %13, %385 : vector<8x256xf32>
      %387 = arith.addf %383, %386 : vector<8x256xf32>
      %c2_179 = arith.constant 2 : index
      %c15_180 = arith.constant 15 : index
      %388 = memref.load %arg2[%c2_179, %c15_180] : memref<4x32xf32, #tpu.memory_space<smem>>
      %389 = vector.broadcast %388 : f32 to vector<8x256xf32>
      %390 = arith.mulf %15, %389 : vector<8x256xf32>
      %391 = arith.addf %387, %390 : vector<8x256xf32>
      %c3_181 = arith.constant 3 : index
      %c15_182 = arith.constant 15 : index
      %392 = memref.load %arg2[%c3_181, %c15_182] : memref<4x32xf32, #tpu.memory_space<smem>>
      %393 = vector.broadcast %392 : f32 to vector<8x256xf32>
      %394 = arith.mulf %17, %393 : vector<8x256xf32>
      %395 = arith.addf %391, %394 : vector<8x256xf32>
      %cst_183 = arith.constant 0.000000e+00 : f32
      %396 = vector.broadcast %cst_183 : f32 to vector<8x256xf32>
      %397 = arith.maximumf %395, %396 : vector<8x256xf32>
      %cst_184 = arith.constant dense<0.000000e+00> : vector<8xf32>
      %398 = vector.multi_reduction <add>, %397, %cst_184 [1] : vector<8x256xf32> to vector<8xf32>
      %399 = vector.shape_cast %398 : vector<8xf32> to vector<8x1xf32>
      %cst_185 = arith.constant 3.906250e-03 : f32
      %400 = vector.broadcast %cst_185 : f32 to vector<8x1xf32>
      %401 = arith.mulf %399, %400 : vector<8x1xf32>
      %c0_186 = arith.constant 0 : index
      %c16 = arith.constant 16 : index
      %402 = memref.load %arg2[%c0_186, %c16] : memref<4x32xf32, #tpu.memory_space<smem>>
      %403 = vector.broadcast %402 : f32 to vector<8x256xf32>
      %404 = arith.mulf %11, %403 : vector<8x256xf32>
      %c16_187 = arith.constant 16 : index
      %405 = memref.load %arg3[%c16_187] : memref<32xf32, #tpu.memory_space<smem>>
      %406 = vector.broadcast %405 : f32 to vector<8x256xf32>
      %407 = arith.addf %404, %406 : vector<8x256xf32>
      %c1_188 = arith.constant 1 : index
      %c16_189 = arith.constant 16 : index
      %408 = memref.load %arg2[%c1_188, %c16_189] : memref<4x32xf32, #tpu.memory_space<smem>>
      %409 = vector.broadcast %408 : f32 to vector<8x256xf32>
      %410 = arith.mulf %13, %409 : vector<8x256xf32>
      %411 = arith.addf %407, %410 : vector<8x256xf32>
      %c2_190 = arith.constant 2 : index
      %c16_191 = arith.constant 16 : index
      %412 = memref.load %arg2[%c2_190, %c16_191] : memref<4x32xf32, #tpu.memory_space<smem>>
      %413 = vector.broadcast %412 : f32 to vector<8x256xf32>
      %414 = arith.mulf %15, %413 : vector<8x256xf32>
      %415 = arith.addf %411, %414 : vector<8x256xf32>
      %c3_192 = arith.constant 3 : index
      %c16_193 = arith.constant 16 : index
      %416 = memref.load %arg2[%c3_192, %c16_193] : memref<4x32xf32, #tpu.memory_space<smem>>
      %417 = vector.broadcast %416 : f32 to vector<8x256xf32>
      %418 = arith.mulf %17, %417 : vector<8x256xf32>
      %419 = arith.addf %415, %418 : vector<8x256xf32>
      %cst_194 = arith.constant 0.000000e+00 : f32
      %420 = vector.broadcast %cst_194 : f32 to vector<8x256xf32>
      %421 = arith.maximumf %419, %420 : vector<8x256xf32>
      %cst_195 = arith.constant dense<0.000000e+00> : vector<8xf32>
      %422 = vector.multi_reduction <add>, %421, %cst_195 [1] : vector<8x256xf32> to vector<8xf32>
      %423 = vector.shape_cast %422 : vector<8xf32> to vector<8x1xf32>
      %cst_196 = arith.constant 3.906250e-03 : f32
      %424 = vector.broadcast %cst_196 : f32 to vector<8x1xf32>
      %425 = arith.mulf %423, %424 : vector<8x1xf32>
      %c0_197 = arith.constant 0 : index
      %c17 = arith.constant 17 : index
      %426 = memref.load %arg2[%c0_197, %c17] : memref<4x32xf32, #tpu.memory_space<smem>>
      %427 = vector.broadcast %426 : f32 to vector<8x256xf32>
      %428 = arith.mulf %11, %427 : vector<8x256xf32>
      %c17_198 = arith.constant 17 : index
      %429 = memref.load %arg3[%c17_198] : memref<32xf32, #tpu.memory_space<smem>>
      %430 = vector.broadcast %429 : f32 to vector<8x256xf32>
      %431 = arith.addf %428, %430 : vector<8x256xf32>
      %c1_199 = arith.constant 1 : index
      %c17_200 = arith.constant 17 : index
      %432 = memref.load %arg2[%c1_199, %c17_200] : memref<4x32xf32, #tpu.memory_space<smem>>
      %433 = vector.broadcast %432 : f32 to vector<8x256xf32>
      %434 = arith.mulf %13, %433 : vector<8x256xf32>
      %435 = arith.addf %431, %434 : vector<8x256xf32>
      %c2_201 = arith.constant 2 : index
      %c17_202 = arith.constant 17 : index
      %436 = memref.load %arg2[%c2_201, %c17_202] : memref<4x32xf32, #tpu.memory_space<smem>>
      %437 = vector.broadcast %436 : f32 to vector<8x256xf32>
      %438 = arith.mulf %15, %437 : vector<8x256xf32>
      %439 = arith.addf %435, %438 : vector<8x256xf32>
      %c3_203 = arith.constant 3 : index
      %c17_204 = arith.constant 17 : index
      %440 = memref.load %arg2[%c3_203, %c17_204] : memref<4x32xf32, #tpu.memory_space<smem>>
      %441 = vector.broadcast %440 : f32 to vector<8x256xf32>
      %442 = arith.mulf %17, %441 : vector<8x256xf32>
      %443 = arith.addf %439, %442 : vector<8x256xf32>
      %cst_205 = arith.constant 0.000000e+00 : f32
      %444 = vector.broadcast %cst_205 : f32 to vector<8x256xf32>
      %445 = arith.maximumf %443, %444 : vector<8x256xf32>
      %cst_206 = arith.constant dense<0.000000e+00> : vector<8xf32>
      %446 = vector.multi_reduction <add>, %445, %cst_206 [1] : vector<8x256xf32> to vector<8xf32>
      %447 = vector.shape_cast %446 : vector<8xf32> to vector<8x1xf32>
      %cst_207 = arith.constant 3.906250e-03 : f32
      %448 = vector.broadcast %cst_207 : f32 to vector<8x1xf32>
      %449 = arith.mulf %447, %448 : vector<8x1xf32>
      %c0_208 = arith.constant 0 : index
      %c18 = arith.constant 18 : index
      %450 = memref.load %arg2[%c0_208, %c18] : memref<4x32xf32, #tpu.memory_space<smem>>
      %451 = vector.broadcast %450 : f32 to vector<8x256xf32>
      %452 = arith.mulf %11, %451 : vector<8x256xf32>
      %c18_209 = arith.constant 18 : index
      %453 = memref.load %arg3[%c18_209] : memref<32xf32, #tpu.memory_space<smem>>
      %454 = vector.broadcast %453 : f32 to vector<8x256xf32>
      %455 = arith.addf %452, %454 : vector<8x256xf32>
      %c1_210 = arith.constant 1 : index
      %c18_211 = arith.constant 18 : index
      %456 = memref.load %arg2[%c1_210, %c18_211] : memref<4x32xf32, #tpu.memory_space<smem>>
      %457 = vector.broadcast %456 : f32 to vector<8x256xf32>
      %458 = arith.mulf %13, %457 : vector<8x256xf32>
      %459 = arith.addf %455, %458 : vector<8x256xf32>
      %c2_212 = arith.constant 2 : index
      %c18_213 = arith.constant 18 : index
      %460 = memref.load %arg2[%c2_212, %c18_213] : memref<4x32xf32, #tpu.memory_space<smem>>
      %461 = vector.broadcast %460 : f32 to vector<8x256xf32>
      %462 = arith.mulf %15, %461 : vector<8x256xf32>
      %463 = arith.addf %459, %462 : vector<8x256xf32>
      %c3_214 = arith.constant 3 : index
      %c18_215 = arith.constant 18 : index
      %464 = memref.load %arg2[%c3_214, %c18_215] : memref<4x32xf32, #tpu.memory_space<smem>>
      %465 = vector.broadcast %464 : f32 to vector<8x256xf32>
      %466 = arith.mulf %17, %465 : vector<8x256xf32>
      %467 = arith.addf %463, %466 : vector<8x256xf32>
      %cst_216 = arith.constant 0.000000e+00 : f32
      %468 = vector.broadcast %cst_216 : f32 to vector<8x256xf32>
      %469 = arith.maximumf %467, %468 : vector<8x256xf32>
      %cst_217 = arith.constant dense<0.000000e+00> : vector<8xf32>
      %470 = vector.multi_reduction <add>, %469, %cst_217 [1] : vector<8x256xf32> to vector<8xf32>
      %471 = vector.shape_cast %470 : vector<8xf32> to vector<8x1xf32>
      %cst_218 = arith.constant 3.906250e-03 : f32
      %472 = vector.broadcast %cst_218 : f32 to vector<8x1xf32>
      %473 = arith.mulf %471, %472 : vector<8x1xf32>
      %c0_219 = arith.constant 0 : index
      %c19 = arith.constant 19 : index
      %474 = memref.load %arg2[%c0_219, %c19] : memref<4x32xf32, #tpu.memory_space<smem>>
      %475 = vector.broadcast %474 : f32 to vector<8x256xf32>
      %476 = arith.mulf %11, %475 : vector<8x256xf32>
      %c19_220 = arith.constant 19 : index
      %477 = memref.load %arg3[%c19_220] : memref<32xf32, #tpu.memory_space<smem>>
      %478 = vector.broadcast %477 : f32 to vector<8x256xf32>
      %479 = arith.addf %476, %478 : vector<8x256xf32>
      %c1_221 = arith.constant 1 : index
      %c19_222 = arith.constant 19 : index
      %480 = memref.load %arg2[%c1_221, %c19_222] : memref<4x32xf32, #tpu.memory_space<smem>>
      %481 = vector.broadcast %480 : f32 to vector<8x256xf32>
      %482 = arith.mulf %13, %481 : vector<8x256xf32>
      %483 = arith.addf %479, %482 : vector<8x256xf32>
      %c2_223 = arith.constant 2 : index
      %c19_224 = arith.constant 19 : index
      %484 = memref.load %arg2[%c2_223, %c19_224] : memref<4x32xf32, #tpu.memory_space<smem>>
      %485 = vector.broadcast %484 : f32 to vector<8x256xf32>
      %486 = arith.mulf %15, %485 : vector<8x256xf32>
      %487 = arith.addf %483, %486 : vector<8x256xf32>
      %c3_225 = arith.constant 3 : index
      %c19_226 = arith.constant 19 : index
      %488 = memref.load %arg2[%c3_225, %c19_226] : memref<4x32xf32, #tpu.memory_space<smem>>
      %489 = vector.broadcast %488 : f32 to vector<8x256xf32>
      %490 = arith.mulf %17, %489 : vector<8x256xf32>
      %491 = arith.addf %487, %490 : vector<8x256xf32>
      %cst_227 = arith.constant 0.000000e+00 : f32
      %492 = vector.broadcast %cst_227 : f32 to vector<8x256xf32>
      %493 = arith.maximumf %491, %492 : vector<8x256xf32>
      %cst_228 = arith.constant dense<0.000000e+00> : vector<8xf32>
      %494 = vector.multi_reduction <add>, %493, %cst_228 [1] : vector<8x256xf32> to vector<8xf32>
      %495 = vector.shape_cast %494 : vector<8xf32> to vector<8x1xf32>
      %cst_229 = arith.constant 3.906250e-03 : f32
      %496 = vector.broadcast %cst_229 : f32 to vector<8x1xf32>
      %497 = arith.mulf %495, %496 : vector<8x1xf32>
      %c0_230 = arith.constant 0 : index
      %c20 = arith.constant 20 : index
      %498 = memref.load %arg2[%c0_230, %c20] : memref<4x32xf32, #tpu.memory_space<smem>>
      %499 = vector.broadcast %498 : f32 to vector<8x256xf32>
      %500 = arith.mulf %11, %499 : vector<8x256xf32>
      %c20_231 = arith.constant 20 : index
      %501 = memref.load %arg3[%c20_231] : memref<32xf32, #tpu.memory_space<smem>>
      %502 = vector.broadcast %501 : f32 to vector<8x256xf32>
      %503 = arith.addf %500, %502 : vector<8x256xf32>
      %c1_232 = arith.constant 1 : index
      %c20_233 = arith.constant 20 : index
      %504 = memref.load %arg2[%c1_232, %c20_233] : memref<4x32xf32, #tpu.memory_space<smem>>
      %505 = vector.broadcast %504 : f32 to vector<8x256xf32>
      %506 = arith.mulf %13, %505 : vector<8x256xf32>
      %507 = arith.addf %503, %506 : vector<8x256xf32>
      %c2_234 = arith.constant 2 : index
      %c20_235 = arith.constant 20 : index
      %508 = memref.load %arg2[%c2_234, %c20_235] : memref<4x32xf32, #tpu.memory_space<smem>>
      %509 = vector.broadcast %508 : f32 to vector<8x256xf32>
      %510 = arith.mulf %15, %509 : vector<8x256xf32>
      %511 = arith.addf %507, %510 : vector<8x256xf32>
      %c3_236 = arith.constant 3 : index
      %c20_237 = arith.constant 20 : index
      %512 = memref.load %arg2[%c3_236, %c20_237] : memref<4x32xf32, #tpu.memory_space<smem>>
      %513 = vector.broadcast %512 : f32 to vector<8x256xf32>
      %514 = arith.mulf %17, %513 : vector<8x256xf32>
      %515 = arith.addf %511, %514 : vector<8x256xf32>
      %cst_238 = arith.constant 0.000000e+00 : f32
      %516 = vector.broadcast %cst_238 : f32 to vector<8x256xf32>
      %517 = arith.maximumf %515, %516 : vector<8x256xf32>
      %cst_239 = arith.constant dense<0.000000e+00> : vector<8xf32>
      %518 = vector.multi_reduction <add>, %517, %cst_239 [1] : vector<8x256xf32> to vector<8xf32>
      %519 = vector.shape_cast %518 : vector<8xf32> to vector<8x1xf32>
      %cst_240 = arith.constant 3.906250e-03 : f32
      %520 = vector.broadcast %cst_240 : f32 to vector<8x1xf32>
      %521 = arith.mulf %519, %520 : vector<8x1xf32>
      %c0_241 = arith.constant 0 : index
      %c21 = arith.constant 21 : index
      %522 = memref.load %arg2[%c0_241, %c21] : memref<4x32xf32, #tpu.memory_space<smem>>
      %523 = vector.broadcast %522 : f32 to vector<8x256xf32>
      %524 = arith.mulf %11, %523 : vector<8x256xf32>
      %c21_242 = arith.constant 21 : index
      %525 = memref.load %arg3[%c21_242] : memref<32xf32, #tpu.memory_space<smem>>
      %526 = vector.broadcast %525 : f32 to vector<8x256xf32>
      %527 = arith.addf %524, %526 : vector<8x256xf32>
      %c1_243 = arith.constant 1 : index
      %c21_244 = arith.constant 21 : index
      %528 = memref.load %arg2[%c1_243, %c21_244] : memref<4x32xf32, #tpu.memory_space<smem>>
      %529 = vector.broadcast %528 : f32 to vector<8x256xf32>
      %530 = arith.mulf %13, %529 : vector<8x256xf32>
      %531 = arith.addf %527, %530 : vector<8x256xf32>
      %c2_245 = arith.constant 2 : index
      %c21_246 = arith.constant 21 : index
      %532 = memref.load %arg2[%c2_245, %c21_246] : memref<4x32xf32, #tpu.memory_space<smem>>
      %533 = vector.broadcast %532 : f32 to vector<8x256xf32>
      %534 = arith.mulf %15, %533 : vector<8x256xf32>
      %535 = arith.addf %531, %534 : vector<8x256xf32>
      %c3_247 = arith.constant 3 : index
      %c21_248 = arith.constant 21 : index
      %536 = memref.load %arg2[%c3_247, %c21_248] : memref<4x32xf32, #tpu.memory_space<smem>>
      %537 = vector.broadcast %536 : f32 to vector<8x256xf32>
      %538 = arith.mulf %17, %537 : vector<8x256xf32>
      %539 = arith.addf %535, %538 : vector<8x256xf32>
      %cst_249 = arith.constant 0.000000e+00 : f32
      %540 = vector.broadcast %cst_249 : f32 to vector<8x256xf32>
      %541 = arith.maximumf %539, %540 : vector<8x256xf32>
      %cst_250 = arith.constant dense<0.000000e+00> : vector<8xf32>
      %542 = vector.multi_reduction <add>, %541, %cst_250 [1] : vector<8x256xf32> to vector<8xf32>
      %543 = vector.shape_cast %542 : vector<8xf32> to vector<8x1xf32>
      %cst_251 = arith.constant 3.906250e-03 : f32
      %544 = vector.broadcast %cst_251 : f32 to vector<8x1xf32>
      %545 = arith.mulf %543, %544 : vector<8x1xf32>
      %c0_252 = arith.constant 0 : index
      %c22 = arith.constant 22 : index
      %546 = memref.load %arg2[%c0_252, %c22] : memref<4x32xf32, #tpu.memory_space<smem>>
      %547 = vector.broadcast %546 : f32 to vector<8x256xf32>
      %548 = arith.mulf %11, %547 : vector<8x256xf32>
      %c22_253 = arith.constant 22 : index
      %549 = memref.load %arg3[%c22_253] : memref<32xf32, #tpu.memory_space<smem>>
      %550 = vector.broadcast %549 : f32 to vector<8x256xf32>
      %551 = arith.addf %548, %550 : vector<8x256xf32>
      %c1_254 = arith.constant 1 : index
      %c22_255 = arith.constant 22 : index
      %552 = memref.load %arg2[%c1_254, %c22_255] : memref<4x32xf32, #tpu.memory_space<smem>>
      %553 = vector.broadcast %552 : f32 to vector<8x256xf32>
      %554 = arith.mulf %13, %553 : vector<8x256xf32>
      %555 = arith.addf %551, %554 : vector<8x256xf32>
      %c2_256 = arith.constant 2 : index
      %c22_257 = arith.constant 22 : index
      %556 = memref.load %arg2[%c2_256, %c22_257] : memref<4x32xf32, #tpu.memory_space<smem>>
      %557 = vector.broadcast %556 : f32 to vector<8x256xf32>
      %558 = arith.mulf %15, %557 : vector<8x256xf32>
      %559 = arith.addf %555, %558 : vector<8x256xf32>
      %c3_258 = arith.constant 3 : index
      %c22_259 = arith.constant 22 : index
      %560 = memref.load %arg2[%c3_258, %c22_259] : memref<4x32xf32, #tpu.memory_space<smem>>
      %561 = vector.broadcast %560 : f32 to vector<8x256xf32>
      %562 = arith.mulf %17, %561 : vector<8x256xf32>
      %563 = arith.addf %559, %562 : vector<8x256xf32>
      %cst_260 = arith.constant 0.000000e+00 : f32
      %564 = vector.broadcast %cst_260 : f32 to vector<8x256xf32>
      %565 = arith.maximumf %563, %564 : vector<8x256xf32>
      %cst_261 = arith.constant dense<0.000000e+00> : vector<8xf32>
      %566 = vector.multi_reduction <add>, %565, %cst_261 [1] : vector<8x256xf32> to vector<8xf32>
      %567 = vector.shape_cast %566 : vector<8xf32> to vector<8x1xf32>
      %cst_262 = arith.constant 3.906250e-03 : f32
      %568 = vector.broadcast %cst_262 : f32 to vector<8x1xf32>
      %569 = arith.mulf %567, %568 : vector<8x1xf32>
      %c0_263 = arith.constant 0 : index
      %c23 = arith.constant 23 : index
      %570 = memref.load %arg2[%c0_263, %c23] : memref<4x32xf32, #tpu.memory_space<smem>>
      %571 = vector.broadcast %570 : f32 to vector<8x256xf32>
      %572 = arith.mulf %11, %571 : vector<8x256xf32>
      %c23_264 = arith.constant 23 : index
      %573 = memref.load %arg3[%c23_264] : memref<32xf32, #tpu.memory_space<smem>>
      %574 = vector.broadcast %573 : f32 to vector<8x256xf32>
      %575 = arith.addf %572, %574 : vector<8x256xf32>
      %c1_265 = arith.constant 1 : index
      %c23_266 = arith.constant 23 : index
      %576 = memref.load %arg2[%c1_265, %c23_266] : memref<4x32xf32, #tpu.memory_space<smem>>
      %577 = vector.broadcast %576 : f32 to vector<8x256xf32>
      %578 = arith.mulf %13, %577 : vector<8x256xf32>
      %579 = arith.addf %575, %578 : vector<8x256xf32>
      %c2_267 = arith.constant 2 : index
      %c23_268 = arith.constant 23 : index
      %580 = memref.load %arg2[%c2_267, %c23_268] : memref<4x32xf32, #tpu.memory_space<smem>>
      %581 = vector.broadcast %580 : f32 to vector<8x256xf32>
      %582 = arith.mulf %15, %581 : vector<8x256xf32>
      %583 = arith.addf %579, %582 : vector<8x256xf32>
      %c3_269 = arith.constant 3 : index
      %c23_270 = arith.constant 23 : index
      %584 = memref.load %arg2[%c3_269, %c23_270] : memref<4x32xf32, #tpu.memory_space<smem>>
      %585 = vector.broadcast %584 : f32 to vector<8x256xf32>
      %586 = arith.mulf %17, %585 : vector<8x256xf32>
      %587 = arith.addf %583, %586 : vector<8x256xf32>
      %cst_271 = arith.constant 0.000000e+00 : f32
      %588 = vector.broadcast %cst_271 : f32 to vector<8x256xf32>
      %589 = arith.maximumf %587, %588 : vector<8x256xf32>
      %cst_272 = arith.constant dense<0.000000e+00> : vector<8xf32>
      %590 = vector.multi_reduction <add>, %589, %cst_272 [1] : vector<8x256xf32> to vector<8xf32>
      %591 = vector.shape_cast %590 : vector<8xf32> to vector<8x1xf32>
      %cst_273 = arith.constant 3.906250e-03 : f32
      %592 = vector.broadcast %cst_273 : f32 to vector<8x1xf32>
      %593 = arith.mulf %591, %592 : vector<8x1xf32>
      %c0_274 = arith.constant 0 : index
      %c24 = arith.constant 24 : index
      %594 = memref.load %arg2[%c0_274, %c24] : memref<4x32xf32, #tpu.memory_space<smem>>
      %595 = vector.broadcast %594 : f32 to vector<8x256xf32>
      %596 = arith.mulf %11, %595 : vector<8x256xf32>
      %c24_275 = arith.constant 24 : index
      %597 = memref.load %arg3[%c24_275] : memref<32xf32, #tpu.memory_space<smem>>
      %598 = vector.broadcast %597 : f32 to vector<8x256xf32>
      %599 = arith.addf %596, %598 : vector<8x256xf32>
      %c1_276 = arith.constant 1 : index
      %c24_277 = arith.constant 24 : index
      %600 = memref.load %arg2[%c1_276, %c24_277] : memref<4x32xf32, #tpu.memory_space<smem>>
      %601 = vector.broadcast %600 : f32 to vector<8x256xf32>
      %602 = arith.mulf %13, %601 : vector<8x256xf32>
      %603 = arith.addf %599, %602 : vector<8x256xf32>
      %c2_278 = arith.constant 2 : index
      %c24_279 = arith.constant 24 : index
      %604 = memref.load %arg2[%c2_278, %c24_279] : memref<4x32xf32, #tpu.memory_space<smem>>
      %605 = vector.broadcast %604 : f32 to vector<8x256xf32>
      %606 = arith.mulf %15, %605 : vector<8x256xf32>
      %607 = arith.addf %603, %606 : vector<8x256xf32>
      %c3_280 = arith.constant 3 : index
      %c24_281 = arith.constant 24 : index
      %608 = memref.load %arg2[%c3_280, %c24_281] : memref<4x32xf32, #tpu.memory_space<smem>>
      %609 = vector.broadcast %608 : f32 to vector<8x256xf32>
      %610 = arith.mulf %17, %609 : vector<8x256xf32>
      %611 = arith.addf %607, %610 : vector<8x256xf32>
      %cst_282 = arith.constant 0.000000e+00 : f32
      %612 = vector.broadcast %cst_282 : f32 to vector<8x256xf32>
      %613 = arith.maximumf %611, %612 : vector<8x256xf32>
      %cst_283 = arith.constant dense<0.000000e+00> : vector<8xf32>
      %614 = vector.multi_reduction <add>, %613, %cst_283 [1] : vector<8x256xf32> to vector<8xf32>
      %615 = vector.shape_cast %614 : vector<8xf32> to vector<8x1xf32>
      %cst_284 = arith.constant 3.906250e-03 : f32
      %616 = vector.broadcast %cst_284 : f32 to vector<8x1xf32>
      %617 = arith.mulf %615, %616 : vector<8x1xf32>
      %c0_285 = arith.constant 0 : index
      %c25 = arith.constant 25 : index
      %618 = memref.load %arg2[%c0_285, %c25] : memref<4x32xf32, #tpu.memory_space<smem>>
      %619 = vector.broadcast %618 : f32 to vector<8x256xf32>
      %620 = arith.mulf %11, %619 : vector<8x256xf32>
      %c25_286 = arith.constant 25 : index
      %621 = memref.load %arg3[%c25_286] : memref<32xf32, #tpu.memory_space<smem>>
      %622 = vector.broadcast %621 : f32 to vector<8x256xf32>
      %623 = arith.addf %620, %622 : vector<8x256xf32>
      %c1_287 = arith.constant 1 : index
      %c25_288 = arith.constant 25 : index
      %624 = memref.load %arg2[%c1_287, %c25_288] : memref<4x32xf32, #tpu.memory_space<smem>>
      %625 = vector.broadcast %624 : f32 to vector<8x256xf32>
      %626 = arith.mulf %13, %625 : vector<8x256xf32>
      %627 = arith.addf %623, %626 : vector<8x256xf32>
      %c2_289 = arith.constant 2 : index
      %c25_290 = arith.constant 25 : index
      %628 = memref.load %arg2[%c2_289, %c25_290] : memref<4x32xf32, #tpu.memory_space<smem>>
      %629 = vector.broadcast %628 : f32 to vector<8x256xf32>
      %630 = arith.mulf %15, %629 : vector<8x256xf32>
      %631 = arith.addf %627, %630 : vector<8x256xf32>
      %c3_291 = arith.constant 3 : index
      %c25_292 = arith.constant 25 : index
      %632 = memref.load %arg2[%c3_291, %c25_292] : memref<4x32xf32, #tpu.memory_space<smem>>
      %633 = vector.broadcast %632 : f32 to vector<8x256xf32>
      %634 = arith.mulf %17, %633 : vector<8x256xf32>
      %635 = arith.addf %631, %634 : vector<8x256xf32>
      %cst_293 = arith.constant 0.000000e+00 : f32
      %636 = vector.broadcast %cst_293 : f32 to vector<8x256xf32>
      %637 = arith.maximumf %635, %636 : vector<8x256xf32>
      %cst_294 = arith.constant dense<0.000000e+00> : vector<8xf32>
      %638 = vector.multi_reduction <add>, %637, %cst_294 [1] : vector<8x256xf32> to vector<8xf32>
      %639 = vector.shape_cast %638 : vector<8xf32> to vector<8x1xf32>
      %cst_295 = arith.constant 3.906250e-03 : f32
      %640 = vector.broadcast %cst_295 : f32 to vector<8x1xf32>
      %641 = arith.mulf %639, %640 : vector<8x1xf32>
      %c0_296 = arith.constant 0 : index
      %c26 = arith.constant 26 : index
      %642 = memref.load %arg2[%c0_296, %c26] : memref<4x32xf32, #tpu.memory_space<smem>>
      %643 = vector.broadcast %642 : f32 to vector<8x256xf32>
      %644 = arith.mulf %11, %643 : vector<8x256xf32>
      %c26_297 = arith.constant 26 : index
      %645 = memref.load %arg3[%c26_297] : memref<32xf32, #tpu.memory_space<smem>>
      %646 = vector.broadcast %645 : f32 to vector<8x256xf32>
      %647 = arith.addf %644, %646 : vector<8x256xf32>
      %c1_298 = arith.constant 1 : index
      %c26_299 = arith.constant 26 : index
      %648 = memref.load %arg2[%c1_298, %c26_299] : memref<4x32xf32, #tpu.memory_space<smem>>
      %649 = vector.broadcast %648 : f32 to vector<8x256xf32>
      %650 = arith.mulf %13, %649 : vector<8x256xf32>
      %651 = arith.addf %647, %650 : vector<8x256xf32>
      %c2_300 = arith.constant 2 : index
      %c26_301 = arith.constant 26 : index
      %652 = memref.load %arg2[%c2_300, %c26_301] : memref<4x32xf32, #tpu.memory_space<smem>>
      %653 = vector.broadcast %652 : f32 to vector<8x256xf32>
      %654 = arith.mulf %15, %653 : vector<8x256xf32>
      %655 = arith.addf %651, %654 : vector<8x256xf32>
      %c3_302 = arith.constant 3 : index
      %c26_303 = arith.constant 26 : index
      %656 = memref.load %arg2[%c3_302, %c26_303] : memref<4x32xf32, #tpu.memory_space<smem>>
      %657 = vector.broadcast %656 : f32 to vector<8x256xf32>
      %658 = arith.mulf %17, %657 : vector<8x256xf32>
      %659 = arith.addf %655, %658 : vector<8x256xf32>
      %cst_304 = arith.constant 0.000000e+00 : f32
      %660 = vector.broadcast %cst_304 : f32 to vector<8x256xf32>
      %661 = arith.maximumf %659, %660 : vector<8x256xf32>
      %cst_305 = arith.constant dense<0.000000e+00> : vector<8xf32>
      %662 = vector.multi_reduction <add>, %661, %cst_305 [1] : vector<8x256xf32> to vector<8xf32>
      %663 = vector.shape_cast %662 : vector<8xf32> to vector<8x1xf32>
      %cst_306 = arith.constant 3.906250e-03 : f32
      %664 = vector.broadcast %cst_306 : f32 to vector<8x1xf32>
      %665 = arith.mulf %663, %664 : vector<8x1xf32>
      %c0_307 = arith.constant 0 : index
      %c27 = arith.constant 27 : index
      %666 = memref.load %arg2[%c0_307, %c27] : memref<4x32xf32, #tpu.memory_space<smem>>
      %667 = vector.broadcast %666 : f32 to vector<8x256xf32>
      %668 = arith.mulf %11, %667 : vector<8x256xf32>
      %c27_308 = arith.constant 27 : index
      %669 = memref.load %arg3[%c27_308] : memref<32xf32, #tpu.memory_space<smem>>
      %670 = vector.broadcast %669 : f32 to vector<8x256xf32>
      %671 = arith.addf %668, %670 : vector<8x256xf32>
      %c1_309 = arith.constant 1 : index
      %c27_310 = arith.constant 27 : index
      %672 = memref.load %arg2[%c1_309, %c27_310] : memref<4x32xf32, #tpu.memory_space<smem>>
      %673 = vector.broadcast %672 : f32 to vector<8x256xf32>
      %674 = arith.mulf %13, %673 : vector<8x256xf32>
      %675 = arith.addf %671, %674 : vector<8x256xf32>
      %c2_311 = arith.constant 2 : index
      %c27_312 = arith.constant 27 : index
      %676 = memref.load %arg2[%c2_311, %c27_312] : memref<4x32xf32, #tpu.memory_space<smem>>
      %677 = vector.broadcast %676 : f32 to vector<8x256xf32>
      %678 = arith.mulf %15, %677 : vector<8x256xf32>
      %679 = arith.addf %675, %678 : vector<8x256xf32>
      %c3_313 = arith.constant 3 : index
      %c27_314 = arith.constant 27 : index
      %680 = memref.load %arg2[%c3_313, %c27_314] : memref<4x32xf32, #tpu.memory_space<smem>>
      %681 = vector.broadcast %680 : f32 to vector<8x256xf32>
      %682 = arith.mulf %17, %681 : vector<8x256xf32>
      %683 = arith.addf %679, %682 : vector<8x256xf32>
      %cst_315 = arith.constant 0.000000e+00 : f32
      %684 = vector.broadcast %cst_315 : f32 to vector<8x256xf32>
      %685 = arith.maximumf %683, %684 : vector<8x256xf32>
      %cst_316 = arith.constant dense<0.000000e+00> : vector<8xf32>
      %686 = vector.multi_reduction <add>, %685, %cst_316 [1] : vector<8x256xf32> to vector<8xf32>
      %687 = vector.shape_cast %686 : vector<8xf32> to vector<8x1xf32>
      %cst_317 = arith.constant 3.906250e-03 : f32
      %688 = vector.broadcast %cst_317 : f32 to vector<8x1xf32>
      %689 = arith.mulf %687, %688 : vector<8x1xf32>
      %c0_318 = arith.constant 0 : index
      %c28 = arith.constant 28 : index
      %690 = memref.load %arg2[%c0_318, %c28] : memref<4x32xf32, #tpu.memory_space<smem>>
      %691 = vector.broadcast %690 : f32 to vector<8x256xf32>
      %692 = arith.mulf %11, %691 : vector<8x256xf32>
      %c28_319 = arith.constant 28 : index
      %693 = memref.load %arg3[%c28_319] : memref<32xf32, #tpu.memory_space<smem>>
      %694 = vector.broadcast %693 : f32 to vector<8x256xf32>
      %695 = arith.addf %692, %694 : vector<8x256xf32>
      %c1_320 = arith.constant 1 : index
      %c28_321 = arith.constant 28 : index
      %696 = memref.load %arg2[%c1_320, %c28_321] : memref<4x32xf32, #tpu.memory_space<smem>>
      %697 = vector.broadcast %696 : f32 to vector<8x256xf32>
      %698 = arith.mulf %13, %697 : vector<8x256xf32>
      %699 = arith.addf %695, %698 : vector<8x256xf32>
      %c2_322 = arith.constant 2 : index
      %c28_323 = arith.constant 28 : index
      %700 = memref.load %arg2[%c2_322, %c28_323] : memref<4x32xf32, #tpu.memory_space<smem>>
      %701 = vector.broadcast %700 : f32 to vector<8x256xf32>
      %702 = arith.mulf %15, %701 : vector<8x256xf32>
      %703 = arith.addf %699, %702 : vector<8x256xf32>
      %c3_324 = arith.constant 3 : index
      %c28_325 = arith.constant 28 : index
      %704 = memref.load %arg2[%c3_324, %c28_325] : memref<4x32xf32, #tpu.memory_space<smem>>
      %705 = vector.broadcast %704 : f32 to vector<8x256xf32>
      %706 = arith.mulf %17, %705 : vector<8x256xf32>
      %707 = arith.addf %703, %706 : vector<8x256xf32>
      %cst_326 = arith.constant 0.000000e+00 : f32
      %708 = vector.broadcast %cst_326 : f32 to vector<8x256xf32>
      %709 = arith.maximumf %707, %708 : vector<8x256xf32>
      %cst_327 = arith.constant dense<0.000000e+00> : vector<8xf32>
      %710 = vector.multi_reduction <add>, %709, %cst_327 [1] : vector<8x256xf32> to vector<8xf32>
      %711 = vector.shape_cast %710 : vector<8xf32> to vector<8x1xf32>
      %cst_328 = arith.constant 3.906250e-03 : f32
      %712 = vector.broadcast %cst_328 : f32 to vector<8x1xf32>
      %713 = arith.mulf %711, %712 : vector<8x1xf32>
      %c0_329 = arith.constant 0 : index
      %c29 = arith.constant 29 : index
      %714 = memref.load %arg2[%c0_329, %c29] : memref<4x32xf32, #tpu.memory_space<smem>>
      %715 = vector.broadcast %714 : f32 to vector<8x256xf32>
      %716 = arith.mulf %11, %715 : vector<8x256xf32>
      %c29_330 = arith.constant 29 : index
      %717 = memref.load %arg3[%c29_330] : memref<32xf32, #tpu.memory_space<smem>>
      %718 = vector.broadcast %717 : f32 to vector<8x256xf32>
      %719 = arith.addf %716, %718 : vector<8x256xf32>
      %c1_331 = arith.constant 1 : index
      %c29_332 = arith.constant 29 : index
      %720 = memref.load %arg2[%c1_331, %c29_332] : memref<4x32xf32, #tpu.memory_space<smem>>
      %721 = vector.broadcast %720 : f32 to vector<8x256xf32>
      %722 = arith.mulf %13, %721 : vector<8x256xf32>
      %723 = arith.addf %719, %722 : vector<8x256xf32>
      %c2_333 = arith.constant 2 : index
      %c29_334 = arith.constant 29 : index
      %724 = memref.load %arg2[%c2_333, %c29_334] : memref<4x32xf32, #tpu.memory_space<smem>>
      %725 = vector.broadcast %724 : f32 to vector<8x256xf32>
      %726 = arith.mulf %15, %725 : vector<8x256xf32>
      %727 = arith.addf %723, %726 : vector<8x256xf32>
      %c3_335 = arith.constant 3 : index
      %c29_336 = arith.constant 29 : index
      %728 = memref.load %arg2[%c3_335, %c29_336] : memref<4x32xf32, #tpu.memory_space<smem>>
      %729 = vector.broadcast %728 : f32 to vector<8x256xf32>
      %730 = arith.mulf %17, %729 : vector<8x256xf32>
      %731 = arith.addf %727, %730 : vector<8x256xf32>
      %cst_337 = arith.constant 0.000000e+00 : f32
      %732 = vector.broadcast %cst_337 : f32 to vector<8x256xf32>
      %733 = arith.maximumf %731, %732 : vector<8x256xf32>
      %cst_338 = arith.constant dense<0.000000e+00> : vector<8xf32>
      %734 = vector.multi_reduction <add>, %733, %cst_338 [1] : vector<8x256xf32> to vector<8xf32>
      %735 = vector.shape_cast %734 : vector<8xf32> to vector<8x1xf32>
      %cst_339 = arith.constant 3.906250e-03 : f32
      %736 = vector.broadcast %cst_339 : f32 to vector<8x1xf32>
      %737 = arith.mulf %735, %736 : vector<8x1xf32>
      %c0_340 = arith.constant 0 : index
      %c30 = arith.constant 30 : index
      %738 = memref.load %arg2[%c0_340, %c30] : memref<4x32xf32, #tpu.memory_space<smem>>
      %739 = vector.broadcast %738 : f32 to vector<8x256xf32>
      %740 = arith.mulf %11, %739 : vector<8x256xf32>
      %c30_341 = arith.constant 30 : index
      %741 = memref.load %arg3[%c30_341] : memref<32xf32, #tpu.memory_space<smem>>
      %742 = vector.broadcast %741 : f32 to vector<8x256xf32>
      %743 = arith.addf %740, %742 : vector<8x256xf32>
      %c1_342 = arith.constant 1 : index
      %c30_343 = arith.constant 30 : index
      %744 = memref.load %arg2[%c1_342, %c30_343] : memref<4x32xf32, #tpu.memory_space<smem>>
      %745 = vector.broadcast %744 : f32 to vector<8x256xf32>
      %746 = arith.mulf %13, %745 : vector<8x256xf32>
      %747 = arith.addf %743, %746 : vector<8x256xf32>
      %c2_344 = arith.constant 2 : index
      %c30_345 = arith.constant 30 : index
      %748 = memref.load %arg2[%c2_344, %c30_345] : memref<4x32xf32, #tpu.memory_space<smem>>
      %749 = vector.broadcast %748 : f32 to vector<8x256xf32>
      %750 = arith.mulf %15, %749 : vector<8x256xf32>
      %751 = arith.addf %747, %750 : vector<8x256xf32>
      %c3_346 = arith.constant 3 : index
      %c30_347 = arith.constant 30 : index
      %752 = memref.load %arg2[%c3_346, %c30_347] : memref<4x32xf32, #tpu.memory_space<smem>>
      %753 = vector.broadcast %752 : f32 to vector<8x256xf32>
      %754 = arith.mulf %17, %753 : vector<8x256xf32>
      %755 = arith.addf %751, %754 : vector<8x256xf32>
      %cst_348 = arith.constant 0.000000e+00 : f32
      %756 = vector.broadcast %cst_348 : f32 to vector<8x256xf32>
      %757 = arith.maximumf %755, %756 : vector<8x256xf32>
      %cst_349 = arith.constant dense<0.000000e+00> : vector<8xf32>
      %758 = vector.multi_reduction <add>, %757, %cst_349 [1] : vector<8x256xf32> to vector<8xf32>
      %759 = vector.shape_cast %758 : vector<8xf32> to vector<8x1xf32>
      %cst_350 = arith.constant 3.906250e-03 : f32
      %760 = vector.broadcast %cst_350 : f32 to vector<8x1xf32>
      %761 = arith.mulf %759, %760 : vector<8x1xf32>
      %c0_351 = arith.constant 0 : index
      %c31 = arith.constant 31 : index
      %762 = memref.load %arg2[%c0_351, %c31] : memref<4x32xf32, #tpu.memory_space<smem>>
      %763 = vector.broadcast %762 : f32 to vector<8x256xf32>
      %764 = arith.mulf %11, %763 : vector<8x256xf32>
      %c31_352 = arith.constant 31 : index
      %765 = memref.load %arg3[%c31_352] : memref<32xf32, #tpu.memory_space<smem>>
      %766 = vector.broadcast %765 : f32 to vector<8x256xf32>
      %767 = arith.addf %764, %766 : vector<8x256xf32>
      %c1_353 = arith.constant 1 : index
      %c31_354 = arith.constant 31 : index
      %768 = memref.load %arg2[%c1_353, %c31_354] : memref<4x32xf32, #tpu.memory_space<smem>>
      %769 = vector.broadcast %768 : f32 to vector<8x256xf32>
      %770 = arith.mulf %13, %769 : vector<8x256xf32>
      %771 = arith.addf %767, %770 : vector<8x256xf32>
      %c2_355 = arith.constant 2 : index
      %c31_356 = arith.constant 31 : index
      %772 = memref.load %arg2[%c2_355, %c31_356] : memref<4x32xf32, #tpu.memory_space<smem>>
      %773 = vector.broadcast %772 : f32 to vector<8x256xf32>
      %774 = arith.mulf %15, %773 : vector<8x256xf32>
      %775 = arith.addf %771, %774 : vector<8x256xf32>
      %c3_357 = arith.constant 3 : index
      %c31_358 = arith.constant 31 : index
      %776 = memref.load %arg2[%c3_357, %c31_358] : memref<4x32xf32, #tpu.memory_space<smem>>
      %777 = vector.broadcast %776 : f32 to vector<8x256xf32>
      %778 = arith.mulf %17, %777 : vector<8x256xf32>
      %779 = arith.addf %775, %778 : vector<8x256xf32>
      %cst_359 = arith.constant 0.000000e+00 : f32
      %780 = vector.broadcast %cst_359 : f32 to vector<8x256xf32>
      %781 = arith.maximumf %779, %780 : vector<8x256xf32>
      %cst_360 = arith.constant dense<0.000000e+00> : vector<8xf32>
      %782 = vector.multi_reduction <add>, %781, %cst_360 [1] : vector<8x256xf32> to vector<8xf32>
      %783 = vector.shape_cast %782 : vector<8xf32> to vector<8x1xf32>
      %cst_361 = arith.constant 3.906250e-03 : f32
      %784 = vector.broadcast %cst_361 : f32 to vector<8x1xf32>
      %785 = arith.mulf %783, %784 : vector<8x1xf32>
      %786 = tpu.concatenate %41, %65, %89, %113, %137, %161, %185, %209, %233, %257, %281, %305, %329, %353, %377, %401 in 1 : vector<8x1xf32>, vector<8x1xf32>, vector<8x1xf32>, vector<8x1xf32>, vector<8x1xf32>, vector<8x1xf32>, vector<8x1xf32>, vector<8x1xf32>, vector<8x1xf32>, vector<8x1xf32>, vector<8x1xf32>, vector<8x1xf32>, vector<8x1xf32>, vector<8x1xf32>, vector<8x1xf32>, vector<8x1xf32> -> vector<8x16xf32>
      %787 = tpu.concatenate %425, %449, %473, %497, %521, %545, %569, %593, %617, %641, %665, %689, %713, %737, %761, %785 in 1 : vector<8x1xf32>, vector<8x1xf32>, vector<8x1xf32>, vector<8x1xf32>, vector<8x1xf32>, vector<8x1xf32>, vector<8x1xf32>, vector<8x1xf32>, vector<8x1xf32>, vector<8x1xf32>, vector<8x1xf32>, vector<8x1xf32>, vector<8x1xf32>, vector<8x1xf32>, vector<8x1xf32>, vector<8x1xf32> -> vector<8x16xf32>
      %788 = tpu.concatenate %786, %787 in 1 : vector<8x16xf32>, vector<8x16xf32> -> vector<8x32xf32>
      %789 = arith.index_cast %9 : i32 to index
      %c0_362 = arith.constant 0 : index
      %790 = vector.load %arg7[%789, %c0_362] : memref<16x32xf32, #tpu.memory_space<vmem>>, vector<8x32xf32>
      tpu.vector_store %arg7[%789, %c0_362], %788 {strides = array<i32>} : memref<16x32xf32, #tpu.memory_space<vmem>>, vector<8x32xf32>,
    }
    %c2_i32_0 = arith.constant 2 : i32
    %c0 = arith.constant 0 : index
    %c0_1 = arith.constant 0 : index
    %1 = vector.load %arg7[%c0, %c0_1] : memref<16x32xf32, #tpu.memory_space<vmem>>, vector<16x32xf32>
    %c0_2 = arith.constant 0 : index
    %c0_3 = arith.constant 0 : index
    %2 = vector.load %arg4[%c0_2, %c0_3] : memref<32x32xf32, #tpu.memory_space<vmem>>, vector<32x32xf32>
    %cst = arith.constant dense<0.000000e+00> : vector<16x32xf32>
    %3 = tpu.matmul %1, %2, %cst {dimension_numbers = #tpu.dot_dimension_numbers<[1], [0], [0], [1], [0, 0, 1, 1], [], []>} : vector<16x32xf32>, vector<32x32xf32>, vector<16x32xf32> -> vector<16x32xf32>
    %c0_4 = arith.constant 0 : index
    %c0_5 = arith.constant 0 : index
    %4 = vector.load %arg5[%c0_4, %c0_5] : memref<1x32xf32, #tpu.memory_space<vmem>>, vector<1x32xf32>
    %5 = vector.broadcast %4 : vector<1x32xf32> to vector<16x32xf32>
    %6 = arith.addf %3, %5 : vector<16x32xf32>
    %c0_6 = arith.constant 0 : index
    %c0_7 = arith.constant 0 : index
    %7 = vector.load %arg6[%c0_6, %c0_7] : memref<16x32xf32, #tpu.memory_space<vmem>>, vector<16x32xf32>
    tpu.vector_store %arg6[%c0_6, %c0_7], %6 {strides = array<i32>} : memref<16x32xf32, #tpu.memory_space<vmem>>, vector<16x32xf32>,
    return
  }
  func.func @transform_0(%arg0: i32) -> (i32, i32) {
    %c0_i32 = arith.constant 0 : i32
    %c0_i32_0 = arith.constant 0 : i32
    return %arg0, %c0_i32 : i32, i32
  }
  func.func @transform_1(%arg0: i32) -> (i32, i32) {
    %c0_i32 = arith.constant 0 : i32
    %c0_i32_0 = arith.constant 0 : i32
    %c0_i32_1 = arith.constant 0 : i32
    return %c0_i32, %c0_i32_0 : i32, i32
  }
  func.func @transform_2(%arg0: i32) -> i32 {
    %c0_i32 = arith.constant 0 : i32
    %c0_i32_0 = arith.constant 0 : i32
    return %c0_i32 : i32
  }
  func.func @transform_3(%arg0: i32) -> (i32, i32) {
    %c0_i32 = arith.constant 0 : i32
    %c0_i32_0 = arith.constant 0 : i32
    %c0_i32_1 = arith.constant 0 : i32
    return %c0_i32, %c0_i32_0 : i32, i32
  }
  func.func @transform_4(%arg0: i32) -> (i32, i32) {
    %c0_i32 = arith.constant 0 : i32
    %c0_i32_0 = arith.constant 0 : i32
    %c0_i32_1 = arith.constant 0 : i32
    return %c0_i32, %c0_i32_0 : i32, i32
  }
  func.func @transform_5(%arg0: i32) -> (i32, i32) {
    %c0_i32 = arith.constant 0 : i32
    %c0_i32_0 = arith.constant 0 : i32
    return %arg0, %c0_i32 : i32, i32
  }
}

</mosaic_0001>

<llo_original>
// kernel: tpu_custom_call.1
$region0: #{tpu_custom_call.1}
  #allocation0 [shape = 'u32[]', space=smem, size = 0x4, offset = 0x4, fixed_abs, tag = 'smem constant byte address 0x4 - core index']
  #allocation1 [shape = 'u32[144,128]{1,0:T(1,128)}', space=vmem, size = 0x12000, scoped, tag = 'internal scratch']
  #allocation2 [shape = 'f32[16,32]{1,0:T(8,128)}', space=vmem, size = 0x2000, scoped, tag = 'scratch operand']
  %s0 = inlined_call_operand.hbm [shape: f32[16,1024], index: 0, kind: input, shape index: {}]
  %s1 = inlined_call_operand.hbm [shape: f32[4,32], index: 1, kind: input, shape index: {}]
  %s2 = inlined_call_operand.vmem [shape: f32[32], index: 2, kind: input, shape index: {}]
  %s3 = inlined_call_operand.hbm [shape: f32[32,32], index: 3, kind: input, shape index: {}]
  %s4 = inlined_call_operand.vmem [shape: f32[1,32], index: 4, kind: input, shape index: {}]
  %s5 = inlined_call_operand.hbm [shape: f32[16,32], index: 5, kind: output, shape index: {}]
  %s6 = sld [smem:[#allocation0]]
  $region53: #{tpu_custom_call.1} parent=0
    _
  %s8 = ssub.s32 1, %s6
  %s9 = scalar_select 0, %s8, %s6
  $region1: #{tpu_custom_call.1} parent=0
    #allocation3 [shape = 'u8[65536]{0}', space=vmem, size = 0x10000, scoped, tag = 'input window, operand 0, single buffered']
    #allocation4 [shape = 's32[1]{0}', space=sflag, size = 0x4, scoped, tag = 'scoped memory for tpu_custom_call.1']
    #allocation5 [shape = 's32[1]{0}', space=sflag, size = 0x4, scoped, tag = 'scoped memory for tpu_custom_call.1']
    #allocation6 [shape = 's32[1]{0}', space=sflag, size = 0x4, scoped, tag = 'scoped memory for tpu_custom_call.1']
    #allocation7 [shape = 's32[1]{0}', space=sflag, size = 0x4, scoped, tag = 'scoped memory for tpu_custom_call.1']
    #allocation8 [shape = 'u8[2048]{0}', space=smem, size = 0x800, scoped, tag = 'input window, operand 1, single buffered']
    #allocation9 [shape = 'u8[512]{0}', space=smem, size = 0x200, scoped, tag = 'input window, operand 2, single buffered']
    #allocation10 [shape = 'u8[16384]{0}', space=vmem, size = 0x4000, scoped, tag = 'input window, operand 3, single buffered']
    #allocation11 [shape = 's32[1]{0}', space=sflag, size = 0x4, scoped, tag = 'scoped memory for tpu_custom_call.1']
    #allocation12 [shape = 'u8[8192]{0}', space=vmem, size = 0x2000, scoped, tag = 'output window, operand 0, single buffered']
    %10 = vsyncpa [#allocation4], 0
    %11 = vsyncpa [#allocation6], 0
    %12 = vsyncpa [#allocation7], 0
    %13 = vsyncpa [#allocation11], 0
    %14 = vsyncpa [#allocation5], 0
    // Predicated region
    $region2: #{tpu_custom_call.1} parent=1 // pred_check
      _
    $region3: #{tpu_custom_call.1} parent=1 // pred_check_branch
      %16 = sbr.rel (0) target = $region5
    $region4: #{tpu_custom_call.1} parent=1 // pred_region
      %s18 = ssub.s32 2048, 2048
      %19 = vsyncadd [#allocation4], %s18
      %s20 = sshll.u32 [#allocation3], 4
      %s21 = int_to_ptr.vmem [resolvable:$true] %s20
      %26 = dma.hbm_to_vmem [thread:$0]  %s0, 2048, %s21, [#allocation4], 1024, 1024, 64
    $region5: #{tpu_custom_call.1} parent=1 // pred_fallthru
      _
    // Predicated region
    $region6: #{tpu_custom_call.1} parent=1 // pred_check
      _
    $region7: #{tpu_custom_call.1} parent=1 // pred_check_branch
      %28 = sbr.rel (0) target = $region9
    $region8: #{tpu_custom_call.1} parent=1 // pred_region
      %s30 = ssub.s32 64, 64
      %31 = vsyncadd [#allocation6], %s30
      %34 = dma.hbm_to_smem %s1, 64, [#allocation8], [#allocation6]
    $region9: #{tpu_custom_call.1} parent=1 // pred_fallthru
      _
    // Predicated region
    $region10: #{tpu_custom_call.1} parent=1 // pred_check
      _
    $region11: #{tpu_custom_call.1} parent=1 // pred_check_branch
      %36 = sbr.rel (0) target = $region13
    $region12: #{tpu_custom_call.1} parent=1 // pred_region
      %s38 = ssub.s32 16, 16
      %39 = vsyncadd [#allocation7], %s38
      %s41 = sshll.u32 %s2, 4
      %s42 = int_to_ptr.vmem [resolvable:$true] %s41
      %44 = dma.vmem_to_smem %s42, 16, [#allocation9], [#allocation7]
    $region13: #{tpu_custom_call.1} parent=1 // pred_fallthru
      _
    // Predicated region
    $region14: #{tpu_custom_call.1} parent=1 // pred_check
      _
    $region15: #{tpu_custom_call.1} parent=1 // pred_check_branch
      %46 = sbr.rel (0) target = $region17
    $region16: #{tpu_custom_call.1} parent=1 // pred_region
      %s48 = ssub.s32 512, 512
      %49 = vsyncadd [#allocation11], %s48
      %s50 = sshll.u32 [#allocation10], 4
      %s51 = int_to_ptr.vmem [resolvable:$true] %s50
      %56 = dma.hbm_to_vmem [thread:$0]  %s3, 512, %s51, [#allocation11], 128, 128, 8
    $region17: #{tpu_custom_call.1} parent=1 // pred_fallthru
      _
    // Predicated region
    $region18: #{tpu_custom_call.1} parent=1 // pred_check
      _
    $region19: #{tpu_custom_call.1} parent=1 // pred_check_branch
      %58 = sbr.rel (0) target = $region21
    $region20: #{tpu_custom_call.1} parent=1 // pred_region
      _
    $region21: #{tpu_custom_call.1} parent=1 // pred_fallthru
      _
    // Predicated region
    $region22: #{tpu_custom_call.1} parent=1 // pred_check
      _
    $region23: #{tpu_custom_call.1} parent=1 // pred_check_branch
      %60 = sbr.rel (0) target = $region25
    $region24: #{tpu_custom_call.1} parent=1 // pred_region
      %61 = dma.done [#allocation4], 2048
    $region25: #{tpu_custom_call.1} parent=1 // pred_fallthru
      _
    // Predicated region
    $region26: #{tpu_custom_call.1} parent=1 // pred_check
      _
    $region27: #{tpu_custom_call.1} parent=1 // pred_check_branch
      %63 = sbr.rel (0) target = $region29
    $region28: #{tpu_custom_call.1} parent=1 // pred_region
      %64 = dma.done [#allocation6], 64
    $region29: #{tpu_custom_call.1} parent=1 // pred_fallthru
      _
    // Predicated region
    $region30: #{tpu_custom_call.1} parent=1 // pred_check
      _
    $region31: #{tpu_custom_call.1} parent=1 // pred_check_branch
      %66 = sbr.rel (0) target = $region33
    $region32: #{tpu_custom_call.1} parent=1 // pred_region
      %67 = dma.done [#allocation7], 16
    $region33: #{tpu_custom_call.1} parent=1 // pred_fallthru
      _
    // Predicated region
    $region34: #{tpu_custom_call.1} parent=1 // pred_check
      _
    $region35: #{tpu_custom_call.1} parent=1 // pred_check_branch
      %69 = sbr.rel (0) target = $region37
    $region36: #{tpu_custom_call.1} parent=1 // pred_region
      %70 = dma.done [#allocation11], 512
    $region37: #{tpu_custom_call.1} parent=1 // pred_fallthru
      _
    %71 = sfence
    loop: start=0, step=1, limit=2
    $region38: #{tpu_custom_call.1} parent=1 // loop_pre_header
      _
    $region39: #{tpu_custom_call.1} parent=1 // loop_header
      %s73 = sphi 0, %s77
      %p74 = scmp.ge.s32.totalorder %s73, 2
    $region40: #{tpu_custom_call.1} parent=1 // loop_header_branch
      %76 = sbr.rel (%p74) target = $region44
    $region41: #{tpu_custom_call.1} parent=1 // loop_body
      %s78 = smul.u32 %s73, 8
      %s79 = sshra.s32 %s78, 3
      %s80 = sand.u32 %s78, 7
      %s81 = smul.u32 %s79, 8
      %s82 = smul.addr %s81, 8
      %s83 = scalar_lea.vmem [#allocation3], %s82
      %v84 = vld [vmem:[%s83] sm:$0xff]
      %v85 = vld [vmem:[%s83 + $0x8] sm:$0xff]
      %v86 = vld [vmem:[%s83 + $0x10] sm:$0xff]
      %v87 = vld [vmem:[%s83 + $0x18] sm:$0xff]
      %v88 = vld [vmem:[%s83 + $0x20] sm:$0xff]
      %v89 = vld [vmem:[%s83 + $0x28] sm:$0xff]
      %v90 = vld [vmem:[%s83 + $0x30] sm:$0xff]
      %v91 = vld [vmem:[%s83 + $0x38] sm:$0xff]
      %s92 = sld [smem:[#allocation8]]
      %v93 = vstv %s92
      %v94 = vmul.f32 %v84, %v93
      %v95 = vmul.f32 %v85, %v93
      %s96 = sld [smem:[#allocation9]]
      %v97 = vstv %s96
      %v98 = vadd.f32 %v94, %v97
      %v99 = vadd.f32 %v95, %v97
      %s100 = sld [smem:[#allocation8 + $0x80]]
      %v101 = vstv %s100
      %v102 = vmul.f32 %v86, %v101
      %v103 = vmul.f32 %v87, %v101
      %v104 = vadd.f32 %v98, %v102
      %v105 = vadd.f32 %v99, %v103
      %s106 = sld [smem:[#allocation8 + $0x100]]
      %v107 = vstv %s106
      %v108 = vmul.f32 %v88, %v107
      %v109 = vmul.f32 %v89, %v107
      %v110 = vadd.f32 %v104, %v108
      %v111 = vadd.f32 %v105, %v109
      %s112 = sld [smem:[#allocation8 + $0x180]]
      %v113 = vstv %s112
      %v114 = vmul.f32 %v90, %v113
      %v115 = vmul.f32 %v91, %v113
      %v116 = vadd.f32 %v110, %v114
      %v117 = vadd.f32 %v111, %v115
      %v118 = vmax.f32 %v116, 0.0
      %v119 = vmax.f32 %v117, 0.0
      %v120 = vadd.f32 %v118, %v119
      %121 = vadd.xlane.f32.xlu0 %v120
      %v122 = vpop.xlane.xlu0 %121
      %v123 = vmul.f32 %v122, 0.00390625
      %s124 = sld [smem:[#allocation8 + $0x1]]
      %v125 = vstv %s124
      %v126 = vmul.f32 %v84, %v125
      %v127 = vmul.f32 %v85, %v125
      %s128 = sld [smem:[#allocation9 + $0x1]]
      %v129 = vstv %s128
      %v130 = vadd.f32 %v126, %v129
      %v131 = vadd.f32 %v127, %v129
      %s132 = sld [smem:[#allocation8 + $0x81]]
      %v133 = vstv %s132
      %v134 = vmul.f32 %v86, %v133
      %v135 = vmul.f32 %v87, %v133
      %v136 = vadd.f32 %v130, %v134
      %v137 = vadd.f32 %v131, %v135
      %s138 = sld [smem:[#allocation8 + $0x101]]
      %v139 = vstv %s138
      %v140 = vmul.f32 %v88, %v139
      %v141 = vmul.f32 %v89, %v139
      %v142 = vadd.f32 %v136, %v140
      %v143 = vadd.f32 %v137, %v141
      %s144 = sld [smem:[#allocation8 + $0x181]]
      %v145 = vstv %s144
      %v146 = vmul.f32 %v90, %v145
      %v147 = vmul.f32 %v91, %v145
      %v148 = vadd.f32 %v142, %v146
      %v149 = vadd.f32 %v143, %v147
      %v150 = vmax.f32 %v148, 0.0
      %v151 = vmax.f32 %v149, 0.0
      %v152 = vadd.f32 %v150, %v151
      %153 = vadd.xlane.f32.xlu0 %v152
      %v154 = vpop.xlane.xlu0 %153
      %v155 = vmul.f32 %v154, 0.00390625
      %s156 = sld [smem:[#allocation8 + $0x2]]
      %v157 = vstv %s156
      %v158 = vmul.f32 %v84, %v157
      %v159 = vmul.f32 %v85, %v157
      %s160 = sld [smem:[#allocation9 + $0x2]]
      %v161 = vstv %s160
      %v162 = vadd.f32 %v158, %v161
      %v163 = vadd.f32 %v159, %v161
      %s164 = sld [smem:[#allocation8 + $0x82]]
      %v165 = vstv %s164
      %v166 = vmul.f32 %v86, %v165
      %v167 = vmul.f32 %v87, %v165
      %v168 = vadd.f32 %v162, %v166
      %v169 = vadd.f32 %v163, %v167
      %s170 = sld [smem:[#allocation8 + $0x102]]
      %v171 = vstv %s170
      %v172 = vmul.f32 %v88, %v171
      %v173 = vmul.f32 %v89, %v171
      %v174 = vadd.f32 %v168, %v172
      %v175 = vadd.f32 %v169, %v173
      %s176 = sld [smem:[#allocation8 + $0x182]]
      %v177 = vstv %s176
      %v178 = vmul.f32 %v90, %v177
      %v179 = vmul.f32 %v91, %v177
      %v180 = vadd.f32 %v174, %v178
      %v181 = vadd.f32 %v175, %v179
      %v182 = vmax.f32 %v180, 0.0
      %v183 = vmax.f32 %v181, 0.0
      %v184 = vadd.f32 %v182, %v183
      %185 = vadd.xlane.f32.xlu0 %v184
      %v186 = vpop.xlane.xlu0 %185
      %v187 = vmul.f32 %v186, 0.00390625
      %s188 = sld [smem:[#allocation8 + $0x3]]
      %v189 = vstv %s188
      %v190 = vmul.f32 %v84, %v189
      %v191 = vmul.f32 %v85, %v189
      %s192 = sld [smem:[#allocation9 + $0x3]]
      %v193 = vstv %s192
      %v194 = vadd.f32 %v190, %v193
      %v195 = vadd.f32 %v191, %v193
      %s196 = sld [smem:[#allocation8 + $0x83]]
      %v197 = vstv %s196
      %v198 = vmul.f32 %v86, %v197
      %v199 = vmul.f32 %v87, %v197
      %v200 = vadd.f32 %v194, %v198
      %v201 = vadd.f32 %v195, %v199
      %s202 = sld [smem:[#allocation8 + $0x103]]
      %v203 = vstv %s202
      %v204 = vmul.f32 %v88, %v203
      %v205 = vmul.f32 %v89, %v203
      %v206 = vadd.f32 %v200, %v204
      %v207 = vadd.f32 %v201, %v205
      %s208 = sld [smem:[#allocation8 + $0x183]]
      %v209 = vstv %s208
      %v210 = vmul.f32 %v90, %v209
      %v211 = vmul.f32 %v91, %v209
      %v212 = vadd.f32 %v206, %v210
      %v213 = vadd.f32 %v207, %v211
      %v214 = vmax.f32 %v212, 0.0
      %v215 = vmax.f32 %v213, 0.0
      %v216 = vadd.f32 %v214, %v215
      %217 = vadd.xlane.f32.xlu0 %v216
      %v218 = vpop.xlane.xlu0 %217
      %v219 = vmul.f32 %v218, 0.00390625
      %s220 = sld [smem:[#allocation8 + $0x4]]
      %v221 = vstv %s220
      %v222 = vmul.f32 %v84, %v221
      %v223 = vmul.f32 %v85, %v221
      %s224 = sld [smem:[#allocation9 + $0x4]]
      %v225 = vstv %s224
      %v226 = vadd.f32 %v222, %v225
      %v227 = vadd.f32 %v223, %v225
      %s228 = sld [smem:[#allocation8 + $0x84]]
      %v229 = vstv %s228
      %v230 = vmul.f32 %v86, %v229
      %v231 = vmul.f32 %v87, %v229
      %v232 = vadd.f32 %v226, %v230
      %v233 = vadd.f32 %v227, %v231
      %s234 = sld [smem:[#allocation8 + $0x104]]
      %v235 = vstv %s234
      %v236 = vmul.f32 %v88, %v235
      %v237 = vmul.f32 %v89, %v235
      %v238 = vadd.f32 %v232, %v236
      %v239 = vadd.f32 %v233, %v237
      %s240 = sld [smem:[#allocation8 + $0x184]]
      %v241 = vstv %s240
      %v242 = vmul.f32 %v90, %v241
      %v243 = vmul.f32 %v91, %v241
      %v244 = vadd.f32 %v238, %v242
      %v245 = vadd.f32 %v239, %v243
      %v246 = vmax.f32 %v244, 0.0
      %v247 = vmax.f32 %v245, 0.0
      %v248 = vadd.f32 %v246, %v247
      %249 = vadd.xlane.f32.xlu0 %v248
      %v250 = vpop.xlane.xlu0 %249
      %v251 = vmul.f32 %v250, 0.00390625
      %s252 = sld [smem:[#allocation8 + $0x5]]
      %v253 = vstv %s252
      %v254 = vmul.f32 %v84, %v253
      %v255 = vmul.f32 %v85, %v253
      %s256 = sld [smem:[#allocation9 + $0x5]]
      %v257 = vstv %s256
      %v258 = vadd.f32 %v254, %v257
      %v259 = vadd.f32 %v255, %v257
      %s260 = sld [smem:[#allocation8 + $0x85]]
      %v261 = vstv %s260
      %v262 = vmul.f32 %v86, %v261
      %v263 = vmul.f32 %v87, %v261
      %v264 = vadd.f32 %v258, %v262
      %v265 = vadd.f32 %v259, %v263
      %s266 = sld [smem:[#allocation8 + $0x105]]
      %v267 = vstv %s266
      %v268 = vmul.f32 %v88, %v267
      %v269 = vmul.f32 %v89, %v267
      %v270 = vadd.f32 %v264, %v268
      %v271 = vadd.f32 %v265, %v269
      %s272 = sld [smem:[#allocation8 + $0x185]]
      %v273 = vstv %s272
      %v274 = vmul.f32 %v90, %v273
      %v275 = vmul.f32 %v91, %v273
      %v276 = vadd.f32 %v270, %v274
      %v277 = vadd.f32 %v271, %v275
      %v278 = vmax.f32 %v276, 0.0
      %v279 = vmax.f32 %v277, 0.0
      %v280 = vadd.f32 %v278, %v279
      %281 = vadd.xlane.f32.xlu0 %v280
      %v282 = vpop.xlane.xlu0 %281
      %v283 = vmul.f32 %v282, 0.00390625
      %s284 = sld [smem:[#allocation8 + $0x6]]
      %v285 = vstv %s284
      %v286 = vmul.f32 %v84, %v285
      %v287 = vmul.f32 %v85, %v285
      %s288 = sld [smem:[#allocation9 + $0x6]]
      %v289 = vstv %s288
      %v290 = vadd.f32 %v286, %v289
      %v291 = vadd.f32 %v287, %v289
      %s292 = sld [smem:[#allocation8 + $0x86]]
      %v293 = vstv %s292
      %v294 = vmul.f32 %v86, %v293
      %v295 = vmul.f32 %v87, %v293
      %v296 = vadd.f32 %v290, %v294
      %v297 = vadd.f32 %v291, %v295
      %s298 = sld [smem:[#allocation8 + $0x106]]
      %v299 = vstv %s298
      %v300 = vmul.f32 %v88, %v299
      %v301 = vmul.f32 %v89, %v299
      %v302 = vadd.f32 %v296, %v300
      %v303 = vadd.f32 %v297, %v301
      %s304 = sld [smem:[#allocation8 + $0x186]]
      %v305 = vstv %s304
      %v306 = vmul.f32 %v90, %v305
      %v307 = vmul.f32 %v91, %v305
      %v308 = vadd.f32 %v302, %v306
      %v309 = vadd.f32 %v303, %v307
      %v310 = vmax.f32 %v308, 0.0
      %v311 = vmax.f32 %v309, 0.0
      %v312 = vadd.f32 %v310, %v311
      %313 = vadd.xlane.f32.xlu0 %v312
      %v314 = vpop.xlane.xlu0 %313
      %v315 = vmul.f32 %v314, 0.00390625
      %s316 = sld [smem:[#allocation8 + $0x7]]
      %v317 = vstv %s316
      %v318 = vmul.f32 %v84, %v317
      %v319 = vmul.f32 %v85, %v317
      %s320 = sld [smem:[#allocation9 + $0x7]]
      %v321 = vstv %s320
      %v322 = vadd.f32 %v318, %v321
      %v323 = vadd.f32 %v319, %v321
      %s324 = sld [smem:[#allocation8 + $0x87]]
      %v325 = vstv %s324
      %v326 = vmul.f32 %v86, %v325
      %v327 = vmul.f32 %v87, %v325
      %v328 = vadd.f32 %v322, %v326
      %v329 = vadd.f32 %v323, %v327
      %s330 = sld [smem:[#allocation8 + $0x107]]
      %v331 = vstv %s330
      %v332 = vmul.f32 %v88, %v331
      %v333 = vmul.f32 %v89, %v331
      %v334 = vadd.f32 %v328, %v332
      %v335 = vadd.f32 %v329, %v333
      %s336 = sld [smem:[#allocation8 + $0x187]]
      %v337 = vstv %s336
      %v338 = vmul.f32 %v90, %v337
      %v339 = vmul.f32 %v91, %v337
      %v340 = vadd.f32 %v334, %v338
      %v341 = vadd.f32 %v335, %v339
      %v342 = vmax.f32 %v340, 0.0
      %v343 = vmax.f32 %v341, 0.0
      %v344 = vadd.f32 %v342, %v343
      %345 = vadd.xlane.f32.xlu0 %v344
      %v346 = vpop.xlane.xlu0 %345
      %v347 = vmul.f32 %v346, 0.00390625
      %s348 = sld [smem:[#allocation8 + $0x8]]
      %v349 = vstv %s348
      %v350 = vmul.f32 %v84, %v349
      %v351 = vmul.f32 %v85, %v349
      %s352 = sld [smem:[#allocation9 + $0x8]]
      %v353 = vstv %s352
      %v354 = vadd.f32 %v350, %v353
      %v355 = vadd.f32 %v351, %v353
      %s356 = sld [smem:[#allocation8 + $0x88]]
      %v357 = vstv %s356
      %v358 = vmul.f32 %v86, %v357
      %v359 = vmul.f32 %v87, %v357
      %v360 = vadd.f32 %v354, %v358
      %v361 = vadd.f32 %v355, %v359
      %s362 = sld [smem:[#allocation8 + $0x108]]
      %v363 = vstv %s362
      %v364 = vmul.f32 %v88, %v363
      %v365 = vmul.f32 %v89, %v363
      %v366 = vadd.f32 %v360, %v364
      %v367 = vadd.f32 %v361, %v365
      %s368 = sld [smem:[#allocation8 + $0x188]]
      %v369 = vstv %s368
      %v370 = vmul.f32 %v90, %v369
      %v371 = vmul.f32 %v91, %v369
      %v372 = vadd.f32 %v366, %v370
      %v373 = vadd.f32 %v367, %v371
      %v374 = vmax.f32 %v372, 0.0
      %v375 = vmax.f32 %v373, 0.0
      %v376 = vadd.f32 %v374, %v375
      %377 = vadd.xlane.f32.xlu0 %v376
      %v378 = vpop.xlane.xlu0 %377
      %v379 = vmul.f32 %v378, 0.00390625
      %s380 = sld [smem:[#allocation8 + $0x9]]
      %v381 = vstv %s380
      %v382 = vmul.f32 %v84, %v381
      %v383 = vmul.f32 %v85, %v381
      %s384 = sld [smem:[#allocation9 + $0x9]]
      %v385 = vstv %s384
      %v386 = vadd.f32 %v382, %v385
      %v387 = vadd.f32 %v383, %v385
      %s388 = sld [smem:[#allocation8 + $0x89]]
      %v389 = vstv %s388
      %v390 = vmul.f32 %v86, %v389
      %v391 = vmul.f32 %v87, %v389
      %v392 = vadd.f32 %v386, %v390
      %v393 = vadd.f32 %v387, %v391
      %s394 = sld [smem:[#allocation8 + $0x109]]
      %v395 = vstv %s394
      %v396 = vmul.f32 %v88, %v395
      %v397 = vmul.f32 %v89, %v395
      %v398 = vadd.f32 %v392, %v396
      %v399 = vadd.f32 %v393, %v397
      %s400 = sld [smem:[#allocation8 + $0x189]]
      %v401 = vstv %s400
      %v402 = vmul.f32 %v90, %v401
      %v403 = vmul.f32 %v91, %v401
      %v404 = vadd.f32 %v398, %v402
      %v405 = vadd.f32 %v399, %v403
      %v406 = vmax.f32 %v404, 0.0
      %v407 = vmax.f32 %v405, 0.0
      %v408 = vadd.f32 %v406, %v407
      %409 = vadd.xlane.f32.xlu0 %v408
      %v410 = vpop.xlane.xlu0 %409
      %v411 = vmul.f32 %v410, 0.00390625
      %s412 = sld [smem:[#allocation8 + $0xa]]
      %v413 = vstv %s412
      %v414 = vmul.f32 %v84, %v413
      %v415 = vmul.f32 %v85, %v413
      %s416 = sld [smem:[#allocation9 + $0xa]]
      %v417 = vstv %s416
      %v418 = vadd.f32 %v414, %v417
      %v419 = vadd.f32 %v415, %v417
      %s420 = sld [smem:[#allocation8 + $0x8a]]
      %v421 = vstv %s420
      %v422 = vmul.f32 %v86, %v421
      %v423 = vmul.f32 %v87, %v421
      %v424 = vadd.f32 %v418, %v422
      %v425 = vadd.f32 %v419, %v423
      %s426 = sld [smem:[#allocation8 + $0x10a]]
      %v427 = vstv %s426
      %v428 = vmul.f32 %v88, %v427
      %v429 = vmul.f32 %v89, %v427
      %v430 = vadd.f32 %v424, %v428
      %v431 = vadd.f32 %v425, %v429
      %s432 = sld [smem:[#allocation8 + $0x18a]]
      %v433 = vstv %s432
      %v434 = vmul.f32 %v90, %v433
      %v435 = vmul.f32 %v91, %v433
      %v436 = vadd.f32 %v430, %v434
      %v437 = vadd.f32 %v431, %v435
      %v438 = vmax.f32 %v436, 0.0
      %v439 = vmax.f32 %v437, 0.0
      %v440 = vadd.f32 %v438, %v439
      %441 = vadd.xlane.f32.xlu0 %v440
      %v442 = vpop.xlane.xlu0 %441
      %v443 = vmul.f32 %v442, 0.00390625
      %s444 = sld [smem:[#allocation8 + $0xb]]
      %v445 = vstv %s444
      %v446 = vmul.f32 %v84, %v445
      %v447 = vmul.f32 %v85, %v445
      %s448 = sld [smem:[#allocation9 + $0xb]]
      %v449 = vstv %s448
      %v450 = vadd.f32 %v446, %v449
      %v451 = vadd.f32 %v447, %v449
      %s452 = sld [smem:[#allocation8 + $0x8b]]
      %v453 = vstv %s452
      %v454 = vmul.f32 %v86, %v453
      %v455 = vmul.f32 %v87, %v453
      %v456 = vadd.f32 %v450, %v454
      %v457 = vadd.f32 %v451, %v455
      %s458 = sld [smem:[#allocation8 + $0x10b]]
      %v459 = vstv %s458
      %v460 = vmul.f32 %v88, %v459
      %v461 = vmul.f32 %v89, %v459
      %v462 = vadd.f32 %v456, %v460
      %v463 = vadd.f32 %v457, %v461
      %s464 = sld [smem:[#allocation8 + $0x18b]]
      %v465 = vstv %s464
      %v466 = vmul.f32 %v90, %v465
      %v467 = vmul.f32 %v91, %v465
      %v468 = vadd.f32 %v462, %v466
      %v469 = vadd.f32 %v463, %v467
      %v470 = vmax.f32 %v468, 0.0
      %v471 = vmax.f32 %v469, 0.0
      %v472 = vadd.f32 %v470, %v471
      %473 = vadd.xlane.f32.xlu0 %v472
      %v474 = vpop.xlane.xlu0 %473
      %v475 = vmul.f32 %v474, 0.00390625
      %s476 = sld [smem:[#allocation8 + $0xc]]
      %v477 = vstv %s476
      %v478 = vmul.f32 %v84, %v477
      %v479 = vmul.f32 %v85, %v477
      %s480 = sld [smem:[#allocation9 + $0xc]]
      %v481 = vstv %s480
      %v482 = vadd.f32 %v478, %v481
      %v483 = vadd.f32 %v479, %v481
      %s484 = sld [smem:[#allocation8 + $0x8c]]
      %v485 = vstv %s484
      %v486 = vmul.f32 %v86, %v485
      %v487 = vmul.f32 %v87, %v485
      %v488 = vadd.f32 %v482, %v486
      %v489 = vadd.f32 %v483, %v487
      %s490 = sld [smem:[#allocation8 + $0x10c]]
      %v491 = vstv %s490
      %v492 = vmul.f32 %v88, %v491
      %v493 = vmul.f32 %v89, %v491
      %v494 = vadd.f32 %v488, %v492
      %v495 = vadd.f32 %v489, %v493
      %s496 = sld [smem:[#allocation8 + $0x18c]]
      %v497 = vstv %s496
      %v498 = vmul.f32 %v90, %v497
      %v499 = vmul.f32 %v91, %v497
      %v500 = vadd.f32 %v494, %v498
      %v501 = vadd.f32 %v495, %v499
      %v502 = vmax.f32 %v500, 0.0
      %v503 = vmax.f32 %v501, 0.0
      %v504 = vadd.f32 %v502, %v503
      %505 = vadd.xlane.f32.xlu0 %v504
      %v506 = vpop.xlane.xlu0 %505
      %v507 = vmul.f32 %v506, 0.00390625
      %s508 = sld [smem:[#allocation8 + $0xd]]
      %v509 = vstv %s508
      %v510 = vmul.f32 %v84, %v509
      %v511 = vmul.f32 %v85, %v509
      %s512 = sld [smem:[#allocation9 + $0xd]]
      %v513 = vstv %s512
      %v514 = vadd.f32 %v510, %v513
      %v515 = vadd.f32 %v511, %v513
      %s516 = sld [smem:[#allocation8 + $0x8d]]
      %v517 = vstv %s516
      %v518 = vmul.f32 %v86, %v517
      %v519 = vmul.f32 %v87, %v517
      %v520 = vadd.f32 %v514, %v518
      %v521 = vadd.f32 %v515, %v519
      %s522 = sld [smem:[#allocation8 + $0x10d]]
      %v523 = vstv %s522
      %v524 = vmul.f32 %v88, %v523
      %v525 = vmul.f32 %v89, %v523
      %v526 = vadd.f32 %v520, %v524
      %v527 = vadd.f32 %v521, %v525
      %s528 = sld [smem:[#allocation8 + $0x18d]]
      %v529 = vstv %s528
      %v530 = vmul.f32 %v90, %v529
      %v531 = vmul.f32 %v91, %v529
      %v532 = vadd.f32 %v526, %v530
      %v533 = vadd.f32 %v527, %v531
      %v534 = vmax.f32 %v532, 0.0
      %v535 = vmax.f32 %v533, 0.0
      %v536 = vadd.f32 %v534, %v535
      %537 = vadd.xlane.f32.xlu0 %v536
      %v538 = vpop.xlane.xlu0 %537
      %v539 = vmul.f32 %v538, 0.00390625
      %s540 = sld [smem:[#allocation8 + $0xe]]
      %v541 = vstv %s540
      %v542 = vmul.f32 %v84, %v541
      %v543 = vmul.f32 %v85, %v541
      %s544 = sld [smem:[#allocation9 + $0xe]]
      %v545 = vstv %s544
      %v546 = vadd.f32 %v542, %v545
      %v547 = vadd.f32 %v543, %v545
      %s548 = sld [smem:[#allocation8 + $0x8e]]
      %v549 = vstv %s548
      %v550 = vmul.f32 %v86, %v549
      %v551 = vmul.f32 %v87, %v549
      %v552 = vadd.f32 %v546, %v550
      %v553 = vadd.f32 %v547, %v551
      %s554 = sld [smem:[#allocation8 + $0x10e]]
      %v555 = vstv %s554
      %v556 = vmul.f32 %v88, %v555
      %v557 = vmul.f32 %v89, %v555
      %v558 = vadd.f32 %v552, %v556
      %v559 = vadd.f32 %v553, %v557
      %s560 = sld [smem:[#allocation8 + $0x18e]]
      %v561 = vstv %s560
      %v562 = vmul.f32 %v90, %v561
      %v563 = vmul.f32 %v91, %v561
      %v564 = vadd.f32 %v558, %v562
      %v565 = vadd.f32 %v559, %v563
      %v566 = vmax.f32 %v564, 0.0
      %v567 = vmax.f32 %v565, 0.0
      %v568 = vadd.f32 %v566, %v567
      %569 = vadd.xlane.f32.xlu0 %v568
      %v570 = vpop.xlane.xlu0 %569
      %v571 = vmul.f32 %v570, 0.00390625
      %s572 = sld [smem:[#allocation8 + $0xf]]
      %v573 = vstv %s572
      %v574 = vmul.f32 %v84, %v573
      %v575 = vmul.f32 %v85, %v573
      %s576 = sld [smem:[#allocation9 + $0xf]]
      %v577 = vstv %s576
      %v578 = vadd.f32 %v574, %v577
      %v579 = vadd.f32 %v575, %v577
      %s580 = sld [smem:[#allocation8 + $0x8f]]
      %v581 = vstv %s580
      %v582 = vmul.f32 %v86, %v581
      %v583 = vmul.f32 %v87, %v581
      %v584 = vadd.f32 %v578, %v582
      %v585 = vadd.f32 %v579, %v583
      %s586 = sld [smem:[#allocation8 + $0x10f]]
      %v587 = vstv %s586
      %v588 = vmul.f32 %v88, %v587
      %v589 = vmul.f32 %v89, %v587
      %v590 = vadd.f32 %v584, %v588
      %v591 = vadd.f32 %v585, %v589
      %s592 = sld [smem:[#allocation8 + $0x18f]]
      %v593 = vstv %s592
      %v594 = vmul.f32 %v90, %v593
      %v595 = vmul.f32 %v91, %v593
      %v596 = vadd.f32 %v590, %v594
      %v597 = vadd.f32 %v591, %v595
      %v598 = vmax.f32 %v596, 0.0
      %v599 = vmax.f32 %v597, 0.0
      %v600 = vadd.f32 %v598, %v599
      %601 = vadd.xlane.f32.xlu0 %v600
      %v602 = vpop.xlane.xlu0 %601
      %v603 = vmul.f32 %v602, 0.00390625
      %s604 = sld [smem:[#allocation8 + $0x10]]
      %v605 = vstv %s604
      %v606 = vmul.f32 %v84, %v605
      %v607 = vmul.f32 %v85, %v605
      %s608 = sld [smem:[#allocation9 + $0x10]]
      %v609 = vstv %s608
      %v610 = vadd.f32 %v606, %v609
      %v611 = vadd.f32 %v607, %v609
      %s612 = sld [smem:[#allocation8 + $0x90]]
      %v613 = vstv %s612
      %v614 = vmul.f32 %v86, %v613
      %v615 = vmul.f32 %v87, %v613
      %v616 = vadd.f32 %v610, %v614
      %v617 = vadd.f32 %v611, %v615
      %s618 = sld [smem:[#allocation8 + $0x110]]
      %v619 = vstv %s618
      %v620 = vmul.f32 %v88, %v619
      %v621 = vmul.f32 %v89, %v619
      %v622 = vadd.f32 %v616, %v620
      %v623 = vadd.f32 %v617, %v621
      %s624 = sld [smem:[#allocation8 + $0x190]]
      %v625 = vstv %s624
      %v626 = vmul.f32 %v90, %v625
      %v627 = vmul.f32 %v91, %v625
      %v628 = vadd.f32 %v622, %v626
      %v629 = vadd.f32 %v623, %v627
      %v630 = vmax.f32 %v628, 0.0
      %v631 = vmax.f32 %v629, 0.0
      %v632 = vadd.f32 %v630, %v631
      %633 = vadd.xlane.f32.xlu0 %v632
      %v634 = vpop.xlane.xlu0 %633
      %v635 = vmul.f32 %v634, 0.00390625
      %s636 = sld [smem:[#allocation8 + $0x11]]
      %v637 = vstv %s636
      %v638 = vmul.f32 %v84, %v637
      %v639 = vmul.f32 %v85, %v637
      %s640 = sld [smem:[#allocation9 + $0x11]]
      %v641 = vstv %s640
      %v642 = vadd.f32 %v638, %v641
      %v643 = vadd.f32 %v639, %v641
      %s644 = sld [smem:[#allocation8 + $0x91]]
      %v645 = vstv %s644
      %v646 = vmul.f32 %v86, %v645
      %v647 = vmul.f32 %v87, %v645
      %v648 = vadd.f32 %v642, %v646
      %v649 = vadd.f32 %v643, %v647
      %s650 = sld [smem:[#allocation8 + $0x111]]
      %v651 = vstv %s650
      %v652 = vmul.f32 %v88, %v651
      %v653 = vmul.f32 %v89, %v651
      %v654 = vadd.f32 %v648, %v652
      %v655 = vadd.f32 %v649, %v653
      %s656 = sld [smem:[#allocation8 + $0x191]]
      %v657 = vstv %s656
      %v658 = vmul.f32 %v90, %v657
      %v659 = vmul.f32 %v91, %v657
      %v660 = vadd.f32 %v654, %v658
      %v661 = vadd.f32 %v655, %v659
      %v662 = vmax.f32 %v660, 0.0
      %v663 = vmax.f32 %v661, 0.0
      %v664 = vadd.f32 %v662, %v663
      %665 = vadd.xlane.f32.xlu0 %v664
      %v666 = vpop.xlane.xlu0 %665
      %v667 = vmul.f32 %v666, 0.00390625
      %s668 = sld [smem:[#allocation8 + $0x12]]
      %v669 = vstv %s668
      %v670 = vmul.f32 %v84, %v669
      %v671 = vmul.f32 %v85, %v669
      %s672 = sld [smem:[#allocation9 + $0x12]]
      %v673 = vstv %s672
      %v674 = vadd.f32 %v670, %v673
      %v675 = vadd.f32 %v671, %v673
      %s676 = sld [smem:[#allocation8 + $0x92]]
      %v677 = vstv %s676
      %v678 = vmul.f32 %v86, %v677
      %v679 = vmul.f32 %v87, %v677
      %v680 = vadd.f32 %v674, %v678
      %v681 = vadd.f32 %v675, %v679
      %s682 = sld [smem:[#allocation8 + $0x112]]
      %v683 = vstv %s682
      %v684 = vmul.f32 %v88, %v683
      %v685 = vmul.f32 %v89, %v683
      %v686 = vadd.f32 %v680, %v684
      %v687 = vadd.f32 %v681, %v685
      %s688 = sld [smem:[#allocation8 + $0x192]]
      %v689 = vstv %s688
      %v690 = vmul.f32 %v90, %v689
      %v691 = vmul.f32 %v91, %v689
      %v692 = vadd.f32 %v686, %v690
      %v693 = vadd.f32 %v687, %v691
      %v694 = vmax.f32 %v692, 0.0
      %v695 = vmax.f32 %v693, 0.0
      %v696 = vadd.f32 %v694, %v695
      %697 = vadd.xlane.f32.xlu0 %v696
      %v698 = vpop.xlane.xlu0 %697
      %v699 = vmul.f32 %v698, 0.00390625
      %s700 = sld [smem:[#allocation8 + $0x13]]
      %v701 = vstv %s700
      %v702 = vmul.f32 %v84, %v701
      %v703 = vmul.f32 %v85, %v701
      %s704 = sld [smem:[#allocation9 + $0x13]]
      %v705 = vstv %s704
      %v706 = vadd.f32 %v702, %v705
      %v707 = vadd.f32 %v703, %v705
      %s708 = sld [smem:[#allocation8 + $0x93]]
      %v709 = vstv %s708
      %v710 = vmul.f32 %v86, %v709
      %v711 = vmul.f32 %v87, %v709
      %v712 = vadd.f32 %v706, %v710
      %v713 = vadd.f32 %v707, %v711
      %s714 = sld [smem:[#allocation8 + $0x113]]
      %v715 = vstv %s714
      %v716 = vmul.f32 %v88, %v715
      %v717 = vmul.f32 %v89, %v715
      %v718 = vadd.f32 %v712, %v716
      %v719 = vadd.f32 %v713, %v717
      %s720 = sld [smem:[#allocation8 + $0x193]]
      %v721 = vstv %s720
      %v722 = vmul.f32 %v90, %v721
      %v723 = vmul.f32 %v91, %v721
      %v724 = vadd.f32 %v718, %v722
      %v725 = vadd.f32 %v719, %v723
      %v726 = vmax.f32 %v724, 0.0
      %v727 = vmax.f32 %v725, 0.0
      %v728 = vadd.f32 %v726, %v727
      %729 = vadd.xlane.f32.xlu0 %v728
      %v730 = vpop.xlane.xlu0 %729
      %v731 = vmul.f32 %v730, 0.00390625
      %s732 = sld [smem:[#allocation8 + $0x14]]
      %v733 = vstv %s732
      %v734 = vmul.f32 %v84, %v733
      %v735 = vmul.f32 %v85, %v733
      %s736 = sld [smem:[#allocation9 + $0x14]]
      %v737 = vstv %s736
      %v738 = vadd.f32 %v734, %v737
      %v739 = vadd.f32 %v735, %v737
      %s740 = sld [smem:[#allocation8 + $0x94]]
      %v741 = vstv %s740
      %v742 = vmul.f32 %v86, %v741
      %v743 = vmul.f32 %v87, %v741
      %v744 = vadd.f32 %v738, %v742
      %v745 = vadd.f32 %v739, %v743
      %s746 = sld [smem:[#allocation8 + $0x114]]
      %v747 = vstv %s746
      %v748 = vmul.f32 %v88, %v747
      %v749 = vmul.f32 %v89, %v747
      %v750 = vadd.f32 %v744, %v748
      %v751 = vadd.f32 %v745, %v749
      %s752 = sld [smem:[#allocation8 + $0x194]]
      %v753 = vstv %s752
      %v754 = vmul.f32 %v90, %v753
      %v755 = vmul.f32 %v91, %v753
      %v756 = vadd.f32 %v750, %v754
      %v757 = vadd.f32 %v751, %v755
      %v758 = vmax.f32 %v756, 0.0
      %v759 = vmax.f32 %v757, 0.0
      %v760 = vadd.f32 %v758, %v759
      %761 = vadd.xlane.f32.xlu0 %v760
      %v762 = vpop.xlane.xlu0 %761
      %v763 = vmul.f32 %v762, 0.00390625
      %s764 = sld [smem:[#allocation8 + $0x15]]
      %v765 = vstv %s764
      %v766 = vmul.f32 %v84, %v765
      %v767 = vmul.f32 %v85, %v765
      %s768 = sld [smem:[#allocation9 + $0x15]]
      %v769 = vstv %s768
      %v770 = vadd.f32 %v766, %v769
      %v771 = vadd.f32 %v767, %v769
      %s772 = sld [smem:[#allocation8 + $0x95]]
      %v773 = vstv %s772
      %v774 = vmul.f32 %v86, %v773
      %v775 = vmul.f32 %v87, %v773
      %v776 = vadd.f32 %v770, %v774
      %v777 = vadd.f32 %v771, %v775
      %s778 = sld [smem:[#allocation8 + $0x115]]
      %v779 = vstv %s778
      %v780 = vmul.f32 %v88, %v779
      %v781 = vmul.f32 %v89, %v779
      %v782 = vadd.f32 %v776, %v780
      %v783 = vadd.f32 %v777, %v781
      %s784 = sld [smem:[#allocation8 + $0x195]]
      %v785 = vstv %s784
      %v786 = vmul.f32 %v90, %v785
      %v787 = vmul.f32 %v91, %v785
      %v788 = vadd.f32 %v782, %v786
      %v789 = vadd.f32 %v783, %v787
      %v790 = vmax.f32 %v788, 0.0
      %v791 = vmax.f32 %v789, 0.0
      %v792 = vadd.f32 %v790, %v791
      %793 = vadd.xlane.f32.xlu0 %v792
      %v794 = vpop.xlane.xlu0 %793
      %v795 = vmul.f32 %v794, 0.00390625
      %s796 = sld [smem:[#allocation8 + $0x16]]
      %v797 = vstv %s796
      %v798 = vmul.f32 %v84, %v797
      %v799 = vmul.f32 %v85, %v797
      %s800 = sld [smem:[#allocation9 + $0x16]]
      %v801 = vstv %s800
      %v802 = vadd.f32 %v798, %v801
      %v803 = vadd.f32 %v799, %v801
      %s804 = sld [smem:[#allocation8 + $0x96]]
      %v805 = vstv %s804
      %v806 = vmul.f32 %v86, %v805
      %v807 = vmul.f32 %v87, %v805
      %v808 = vadd.f32 %v802, %v806
      %v809 = vadd.f32 %v803, %v807
      %s810 = sld [smem:[#allocation8 + $0x116]]
      %v811 = vstv %s810
      %v812 = vmul.f32 %v88, %v811
      %v813 = vmul.f32 %v89, %v811
      %v814 = vadd.f32 %v808, %v812
      %v815 = vadd.f32 %v809, %v813
      %s816 = sld [smem:[#allocation8 + $0x196]]
      %v817 = vstv %s816
      %v818 = vmul.f32 %v90, %v817
      %v819 = vmul.f32 %v91, %v817
      %v820 = vadd.f32 %v814, %v818
      %v821 = vadd.f32 %v815, %v819
      %v822 = vmax.f32 %v820, 0.0
      %v823 = vmax.f32 %v821, 0.0
      %v824 = vadd.f32 %v822, %v823
      %825 = vadd.xlane.f32.xlu0 %v824
      %v826 = vpop.xlane.xlu0 %825
      %v827 = vmul.f32 %v826, 0.00390625
      %s828 = sld [smem:[#allocation8 + $0x17]]
      %v829 = vstv %s828
      %v830 = vmul.f32 %v84, %v829
      %v831 = vmul.f32 %v85, %v829
      %s832 = sld [smem:[#allocation9 + $0x17]]
      %v833 = vstv %s832
      %v834 = vadd.f32 %v830, %v833
      %v835 = vadd.f32 %v831, %v833
      %s836 = sld [smem:[#allocation8 + $0x97]]
      %v837 = vstv %s836
      %v838 = vmul.f32 %v86, %v837
      %v839 = vmul.f32 %v87, %v837
      %v840 = vadd.f32 %v834, %v838
      %v841 = vadd.f32 %v835, %v839
      %s842 = sld [smem:[#allocation8 + $0x117]]
      %v843 = vstv %s842
      %v844 = vmul.f32 %v88, %v843
      %v845 = vmul.f32 %v89, %v843
      %v846 = vadd.f32 %v840, %v844
      %v847 = vadd.f32 %v841, %v845
      %s848 = sld [smem:[#allocation8 + $0x197]]
      %v849 = vstv %s848
      %v850 = vmul.f32 %v90, %v849
      %v851 = vmul.f32 %v91, %v849
      %v852 = vadd.f32 %v846, %v850
      %v853 = vadd.f32 %v847, %v851
      %v854 = vmax.f32 %v852, 0.0
      %v855 = vmax.f32 %v853, 0.0
      %v856 = vadd.f32 %v854, %v855
      %857 = vadd.xlane.f32.xlu0 %v856
      %v858 = vpop.xlane.xlu0 %857
      %v859 = vmul.f32 %v858, 0.00390625
      %s860 = sld [smem:[#allocation8 + $0x18]]
      %v861 = vstv %s860
      %v862 = vmul.f32 %v84, %v861
      %v863 = vmul.f32 %v85, %v861
      %s864 = sld [smem:[#allocation9 + $0x18]]
      %v865 = vstv %s864
      %v866 = vadd.f32 %v862, %v865
      %v867 = vadd.f32 %v863, %v865
      %s868 = sld [smem:[#allocation8 + $0x98]]
      %v869 = vstv %s868
      %v870 = vmul.f32 %v86, %v869
      %v871 = vmul.f32 %v87, %v869
      %v872 = vadd.f32 %v866, %v870
      %v873 = vadd.f32 %v867, %v871
      %s874 = sld [smem:[#allocation8 + $0x118]]
      %v875 = vstv %s874
      %v876 = vmul.f32 %v88, %v875
      %v877 = vmul.f32 %v89, %v875
      %v878 = vadd.f32 %v872, %v876
      %v879 = vadd.f32 %v873, %v877
      %s880 = sld [smem:[#allocation8 + $0x198]]
      %v881 = vstv %s880
      %v882 = vmul.f32 %v90, %v881
      %v883 = vmul.f32 %v91, %v881
      %v884 = vadd.f32 %v878, %v882
      %v885 = vadd.f32 %v879, %v883
      %v886 = vmax.f32 %v884, 0.0
      %v887 = vmax.f32 %v885, 0.0
      %v888 = vadd.f32 %v886, %v887
      %889 = vadd.xlane.f32.xlu0 %v888
      %v890 = vpop.xlane.xlu0 %889
      %v891 = vmul.f32 %v890, 0.00390625
      %s892 = sld [smem:[#allocation8 + $0x19]]
      %v893 = vstv %s892
      %v894 = vmul.f32 %v84, %v893
      %v895 = vmul.f32 %v85, %v893
      %s896 = sld [smem:[#allocation9 + $0x19]]
      %v897 = vstv %s896
      %v898 = vadd.f32 %v894, %v897
      %v899 = vadd.f32 %v895, %v897
      %s900 = sld [smem:[#allocation8 + $0x99]]
      %v901 = vstv %s900
      %v902 = vmul.f32 %v86, %v901
      %v903 = vmul.f32 %v87, %v901
      %v904 = vadd.f32 %v898, %v902
      %v905 = vadd.f32 %v899, %v903
      %s906 = sld [smem:[#allocation8 + $0x119]]
      %v907 = vstv %s906
      %v908 = vmul.f32 %v88, %v907
      %v909 = vmul.f32 %v89, %v907
      %v910 = vadd.f32 %v904, %v908
      %v911 = vadd.f32 %v905, %v909
      %s912 = sld [smem:[#allocation8 + $0x199]]
      %v913 = vstv %s912
      %v914 = vmul.f32 %v90, %v913
      %v915 = vmul.f32 %v91, %v913
      %v916 = vadd.f32 %v910, %v914
      %v917 = vadd.f32 %v911, %v915
      %v918 = vmax.f32 %v916, 0.0
      %v919 = vmax.f32 %v917, 0.0
      %v920 = vadd.f32 %v918, %v919
      %921 = vadd.xlane.f32.xlu0 %v920
      %v922 = vpop.xlane.xlu0 %921
      %v923 = vmul.f32 %v922, 0.00390625
      %s924 = sld [smem:[#allocation8 + $0x1a]]
      %v925 = vstv %s924
      %v926 = vmul.f32 %v84, %v925
      %v927 = vmul.f32 %v85, %v925
      %s928 = sld [smem:[#allocation9 + $0x1a]]
      %v929 = vstv %s928
      %v930 = vadd.f32 %v926, %v929
      %v931 = vadd.f32 %v927, %v929
      %s932 = sld [smem:[#allocation8 + $0x9a]]
      %v933 = vstv %s932
      %v934 = vmul.f32 %v86, %v933
      %v935 = vmul.f32 %v87, %v933
      %v936 = vadd.f32 %v930, %v934
      %v937 = vadd.f32 %v931, %v935
      %s938 = sld [smem:[#allocation8 + $0x11a]]
      %v939 = vstv %s938
      %v940 = vmul.f32 %v88, %v939
      %v941 = vmul.f32 %v89, %v939
      %v942 = vadd.f32 %v936, %v940
      %v943 = vadd.f32 %v937, %v941
      %s944 = sld [smem:[#allocation8 + $0x19a]]
      %v945 = vstv %s944
      %v946 = vmul.f32 %v90, %v945
      %v947 = vmul.f32 %v91, %v945
      %v948 = vadd.f32 %v942, %v946
      %v949 = vadd.f32 %v943, %v947
      %v950 = vmax.f32 %v948, 0.0
      %v951 = vmax.f32 %v949, 0.0
      %v952 = vadd.f32 %v950, %v951
      %953 = vadd.xlane.f32.xlu0 %v952
      %v954 = vpop.xlane.xlu0 %953
      %v955 = vmul.f32 %v954, 0.00390625
      %s956 = sld [smem:[#allocation8 + $0x1b]]
      %v957 = vstv %s956
      %v958 = vmul.f32 %v84, %v957
      %v959 = vmul.f32 %v85, %v957
      %s960 = sld [smem:[#allocation9 + $0x1b]]
      %v961 = vstv %s960
      %v962 = vadd.f32 %v958, %v961
      %v963 = vadd.f32 %v959, %v961
      %s964 = sld [smem:[#allocation8 + $0x9b]]
      %v965 = vstv %s964
      %v966 = vmul.f32 %v86, %v965
      %v967 = vmul.f32 %v87, %v965
      %v968 = vadd.f32 %v962, %v966
      %v969 = vadd.f32 %v963, %v967
      %s970 = sld [smem:[#allocation8 + $0x11b]]
      %v971 = vstv %s970
      %v972 = vmul.f32 %v88, %v971
      %v973 = vmul.f32 %v89, %v971
      %v974 = vadd.f32 %v968, %v972
      %v975 = vadd.f32 %v969, %v973
      %s976 = sld [smem:[#allocation8 + $0x19b]]
      %v977 = vstv %s976
      %v978 = vmul.f32 %v90, %v977
      %v979 = vmul.f32 %v91, %v977
      %v980 = vadd.f32 %v974, %v978
      %v981 = vadd.f32 %v975, %v979
      %v982 = vmax.f32 %v980, 0.0
      %v983 = vmax.f32 %v981, 0.0
      %v984 = vadd.f32 %v982, %v983
      %985 = vadd.xlane.f32.xlu0 %v984
      %v986 = vpop.xlane.xlu0 %985
      %v987 = vmul.f32 %v986, 0.00390625
      %s988 = sld [smem:[#allocation8 + $0x1c]]
      %v989 = vstv %s988
      %v990 = vmul.f32 %v84, %v989
      %v991 = vmul.f32 %v85, %v989
      %s992 = sld [smem:[#allocation9 + $0x1c]]
      %v993 = vstv %s992
      %v994 = vadd.f32 %v990, %v993
      %v995 = vadd.f32 %v991, %v993
      %s996 = sld [smem:[#allocation8 + $0x9c]]
      %v997 = vstv %s996
      %v998 = vmul.f32 %v86, %v997
      %v999 = vmul.f32 %v87, %v997
      %v1000 = vadd.f32 %v994, %v998
      %v1001 = vadd.f32 %v995, %v999
      %s1002 = sld [smem:[#allocation8 + $0x11c]]
      %v1003 = vstv %s1002
      %v1004 = vmul.f32 %v88, %v1003
      %v1005 = vmul.f32 %v89, %v1003
      %v1006 = vadd.f32 %v1000, %v1004
      %v1007 = vadd.f32 %v1001, %v1005
      %s1008 = sld [smem:[#allocation8 + $0x19c]]
      %v1009 = vstv %s1008
      %v1010 = vmul.f32 %v90, %v1009
      %v1011 = vmul.f32 %v91, %v1009
      %v1012 = vadd.f32 %v1006, %v1010
      %v1013 = vadd.f32 %v1007, %v1011
      %v1014 = vmax.f32 %v1012, 0.0
      %v1015 = vmax.f32 %v1013, 0.0
      %v1016 = vadd.f32 %v1014, %v1015
      %1017 = vadd.xlane.f32.xlu0 %v1016
      %v1018 = vpop.xlane.xlu0 %1017
      %v1019 = vmul.f32 %v1018, 0.00390625
      %s1020 = sld [smem:[#allocation8 + $0x1d]]
      %v1021 = vstv %s1020
      %v1022 = vmul.f32 %v84, %v1021
      %v1023 = vmul.f32 %v85, %v1021
      %s1024 = sld [smem:[#allocation9 + $0x1d]]
      %v1025 = vstv %s1024
      %v1026 = vadd.f32 %v1022, %v1025
      %v1027 = vadd.f32 %v1023, %v1025
      %s1028 = sld [smem:[#allocation8 + $0x9d]]
      %v1029 = vstv %s1028
      %v1030 = vmul.f32 %v86, %v1029
      %v1031 = vmul.f32 %v87, %v1029
      %v1032 = vadd.f32 %v1026, %v1030
      %v1033 = vadd.f32 %v1027, %v1031
      %s1034 = sld [smem:[#allocation8 + $0x11d]]
      %v1035 = vstv %s1034
      %v1036 = vmul.f32 %v88, %v1035
      %v1037 = vmul.f32 %v89, %v1035
      %v1038 = vadd.f32 %v1032, %v1036
      %v1039 = vadd.f32 %v1033, %v1037
      %s1040 = sld [smem:[#allocation8 + $0x19d]]
      %v1041 = vstv %s1040
      %v1042 = vmul.f32 %v90, %v1041
      %v1043 = vmul.f32 %v91, %v1041
      %v1044 = vadd.f32 %v1038, %v1042
      %v1045 = vadd.f32 %v1039, %v1043
      %v1046 = vmax.f32 %v1044, 0.0
      %v1047 = vmax.f32 %v1045, 0.0
      %v1048 = vadd.f32 %v1046, %v1047
      %1049 = vadd.xlane.f32.xlu0 %v1048
      %v1050 = vpop.xlane.xlu0 %1049
      %v1051 = vmul.f32 %v1050, 0.00390625
      %s1052 = sld [smem:[#allocation8 + $0x1e]]
      %v1053 = vstv %s1052
      %v1054 = vmul.f32 %v84, %v1053
      %v1055 = vmul.f32 %v85, %v1053
      %s1056 = sld [smem:[#allocation9 + $0x1e]]
      %v1057 = vstv %s1056
      %v1058 = vadd.f32 %v1054, %v1057
      %v1059 = vadd.f32 %v1055, %v1057
      %s1060 = sld [smem:[#allocation8 + $0x9e]]
      %v1061 = vstv %s1060
      %v1062 = vmul.f32 %v86, %v1061
      %v1063 = vmul.f32 %v87, %v1061
      %v1064 = vadd.f32 %v1058, %v1062
      %v1065 = vadd.f32 %v1059, %v1063
      %s1066 = sld [smem:[#allocation8 + $0x11e]]
      %v1067 = vstv %s1066
      %v1068 = vmul.f32 %v88, %v1067
      %v1069 = vmul.f32 %v89, %v1067
      %v1070 = vadd.f32 %v1064, %v1068
      %v1071 = vadd.f32 %v1065, %v1069
      %s1072 = sld [smem:[#allocation8 + $0x19e]]
      %v1073 = vstv %s1072
      %v1074 = vmul.f32 %v90, %v1073
      %v1075 = vmul.f32 %v91, %v1073
      %v1076 = vadd.f32 %v1070, %v1074
      %v1077 = vadd.f32 %v1071, %v1075
      %v1078 = vmax.f32 %v1076, 0.0
      %v1079 = vmax.f32 %v1077, 0.0
      %v1080 = vadd.f32 %v1078, %v1079
      %1081 = vadd.xlane.f32.xlu0 %v1080
      %v1082 = vpop.xlane.xlu0 %1081
      %v1083 = vmul.f32 %v1082, 0.00390625
      %s1084 = sld [smem:[#allocation8 + $0x1f]]
      %v1085 = vstv %s1084
      %v1086 = vmul.f32 %v84, %v1085
      %v1087 = vmul.f32 %v85, %v1085
      %s1088 = sld [smem:[#allocation9 + $0x1f]]
      %v1089 = vstv %s1088
      %v1090 = vadd.f32 %v1086, %v1089
      %v1091 = vadd.f32 %v1087, %v1089
      %s1092 = sld [smem:[#allocation8 + $0x9f]]
      %v1093 = vstv %s1092
      %v1094 = vmul.f32 %v86, %v1093
      %v1095 = vmul.f32 %v87, %v1093
      %v1096 = vadd.f32 %v1090, %v1094
      %v1097 = vadd.f32 %v1091, %v1095
      %s1098 = sld [smem:[#allocation8 + $0x11f]]
      %v1099 = vstv %s1098
      %v1100 = vmul.f32 %v88, %v1099
      %v1101 = vmul.f32 %v89, %v1099
      %v1102 = vadd.f32 %v1096, %v1100
      %v1103 = vadd.f32 %v1097, %v1101
      %s1104 = sld [smem:[#allocation8 + $0x19f]]
      %v1105 = vstv %s1104
      %v1106 = vmul.f32 %v90, %v1105
      %v1107 = vmul.f32 %v91, %v1105
      %v1108 = vadd.f32 %v1102, %v1106
      %v1109 = vadd.f32 %v1103, %v1107
      %v1110 = vmax.f32 %v1108, 0.0
      %v1111 = vmax.f32 %v1109, 0.0
      %v1112 = vadd.f32 %v1110, %v1111
      %1113 = vadd.xlane.f32.xlu0 %v1112
      %v1114 = vpop.xlane.xlu0 %1113
      %v1115 = vmul.f32 %v1114, 0.00390625
      %vm1116 = vcmask 7168
      %v1117 = vsel %vm1116, %v123, %v155
      %vm1118 = vcmask 15360
      %v1119 = vsel %vm1118, %v1117, %v187
      %vm1120 = vcmask 23552
      %v1121 = vsel %vm1120, %v1119, %v219
      %vm1122 = vcmask 31744
      %v1123 = vsel %vm1122, %v1121, %v251
      %vm1124 = vcmask 39936
      %v1125 = vsel %vm1124, %v1123, %v283
      %vm1126 = vcmask 48128
      %v1127 = vsel %vm1126, %v1125, %v315
      %vm1128 = vcmask 56320
      %v1129 = vsel %vm1128, %v1127, %v347
      %vm1130 = vcmask 64512
      %v1131 = vsel %vm1130, %v1129, %v379
      %vm1132 = vcmask 72704
      %v1133 = vsel %vm1132, %v1131, %v411
      %vm1134 = vcmask 80896
      %v1135 = vsel %vm1134, %v1133, %v443
      %vm1136 = vcmask 89088
      %v1137 = vsel %vm1136, %v1135, %v475
      %vm1138 = vcmask 97280
      %v1139 = vsel %vm1138, %v1137, %v507
      %vm1140 = vcmask 105472
      %v1141 = vsel %vm1140, %v1139, %v539
      %vm1142 = vcmask 113664
      %v1143 = vsel %vm1142, %v1141, %v571
      %vm1144 = vcmask 121856
      %v1145 = vsel %vm1144, %v1143, %v603
      %v1146 = vsel %vm1116, %v635, %v667
      %v1147 = vsel %vm1118, %v1146, %v699
      %v1148 = vsel %vm1120, %v1147, %v731
      %v1149 = vsel %vm1122, %v1148, %v763
      %v1150 = vsel %vm1124, %v1149, %v795
      %v1151 = vsel %vm1126, %v1150, %v827
      %v1152 = vsel %vm1128, %v1151, %v859
      %v1153 = vsel %vm1130, %v1152, %v891
      %v1154 = vsel %vm1132, %v1153, %v923
      %v1155 = vsel %vm1134, %v1154, %v955
      %v1156 = vsel %vm1136, %v1155, %v987
      %v1157 = vsel %vm1138, %v1156, %v1019
      %v1158 = vsel %vm1140, %v1157, %v1051
      %v1159 = vsel %vm1142, %v1158, %v1083
      %v1160 = vsel %vm1144, %v1159, %v1115
      %1162 = vrot.lane.b32.xlu0 %v1160, 16
      %v1163 = vpop.permute.xlu0 %1162
      %vm1165 = vcmask 130048
      %v1166 = vsel %vm1165, %v1145, %v1163
      %s1167 = scalar_lea.vmem [#allocation2], %s78
      %vm1168 = vcmask 261120
      %1169 = vst.msk [vmem:[%s1167] sm:$0xff] %vm1168, %v1166
    $region42: #{tpu_custom_call.1} parent=1 // loop_footer
      %s77 = sadd.s32 1, %s73
    $region43: #{tpu_custom_call.1} parent=1 // loop_footer_branch
      %72 = sbr.rel target = $region39
    $region44: #{tpu_custom_call.1} parent=1 // loop_exit
      _
    %v1170 = vld [vmem:[#allocation2] sm:$0xff]
    %v1171 = vld [vmem:[#allocation2 + $0x8] sm:$0xff]
    %v1172 = vld [vmem:[#allocation10] sm:$0xff]
    %v1173 = vld [vmem:[#allocation10 + $0x8] sm:$0xff]
    %v1174 = vld [vmem:[#allocation10 + $0x10] sm:$0xff]
    %v1175 = vld [vmem:[#allocation10 + $0x18] sm:$0xff]
    %v1176 = vld [vmem:[%s4] sm:$0x1]
    %v1178 = vlaneseq
    %v1179 = vshrl.u32 %v1178, 7
    %v1180 = vsub.s32 0, %v1179
    %v1181 = vrot.slane %v1176, %v1180
    %vm1183 = vcmask 261120
    %v1185 = vsel %vm1183, %v1170, 0
    %v1188 = vsel %vm1183, %v1171, 0
    %1190 = vmatprep.subr.mxu0 0.0
    %1191 = vmatpush1.msra.mxu0 %v1172
    %1192 = vmatprep.subr.mxu0 0.0
    %1193 = vmatpush1.msra.mxu0 %v1173
    %1194 = vmatprep.subr.mxu0 0.0
    %1195 = vmatpush1.msra.mxu0 %v1174
    %1196 = vmatprep.subr.mxu0 0.0
    %1197 = vmatpush1.msra.mxu0 %v1175
    %1198 = vmatprep.subr.mxu0 0.0
    %1199 = vmatpush1.msra.mxu0 0.0
    %1200 = vmatprep.subr.mxu0 0.0
    %1201 = vmatpush1.msra.mxu0 0.0
    %1202 = vmatprep.subr.mxu0 0.0
    %1203 = vmatpush1.msra.mxu0 0.0
    %1204 = vmatprep.subr.mxu0 0.0
    %1205 = vmatpush1.msra.mxu0 0.0
    %1206 = vmatprep.subr.mxu0 0.0
    %1207 = vmatpush1.msra.mxu0 0.0
    %1208 = vmatprep.subr.mxu0 0.0
    %1209 = vmatpush1.msra.mxu0 0.0
    %1210 = vmatprep.subr.mxu0 0.0
    %1211 = vmatpush1.msra.mxu0 0.0
    %1212 = vmatprep.subr.mxu0 0.0
    %1213 = vmatpush1.msra.mxu0 0.0
    %1214 = vmatprep.subr.mxu0 0.0
    %1215 = vmatpush1.msra.mxu0 0.0
    %1216 = vmatprep.subr.mxu0 0.0
    %1217 = vmatpush1.msra.mxu0 0.0
    %1218 = vmatprep.subr.mxu0 0.0
    %1219 = vmatpush1.msra.mxu0 0.0
    %1220 = vmatprep.subr.mxu0 0.0
    %1221 = vmatpush1.msra.mxu0 0.0
    %1222 = vmatprep.subr.mxu0 0.0
    %1223 = vmatpush1.msra.mxu0 0.0
    %1224 = vmatprep.subr.mxu0 0.0
    %1225 = vmatpush1.msra.mxu0 0.0
    %1226 = vmatprep.subr.mxu0 0.0
    %1227 = vmatpush1.msra.mxu0 0.0
    %1228 = vmatprep.subr.mxu0 0.0
    %1229 = vmatpush1.msra.mxu0 0.0
    %1230 = vmatprep.subr.mxu0 0.0
    %1231 = vmatpush1.msra.mxu0 0.0
    %1232 = vmatprep.subr.mxu0 0.0
    %1233 = vmatpush1.msra.mxu0 0.0
    %1234 = vmatprep.subr.mxu0 0.0
    %1235 = vmatpush1.msra.mxu0 0.0
    %1236 = vmatprep.subr.mxu0 0.0
    %1237 = vmatpush1.msra.mxu0 0.0
    %1238 = vmatprep.subr.mxu0 0.0
    %1239 = vmatpush1.msra.mxu0 0.0
    %1240 = vmatprep.subr.mxu0 0.0
    %1241 = vmatpush1.msra.mxu0 0.0
    %1242 = vmatprep.subr.mxu0 0.0
    %1243 = vmatpush1.msra.mxu0 0.0
    %1244 = vmatprep.subr.mxu0 0.0
    %1245 = vmatpush1.msra.mxu0 0.0
    %1246 = vmatprep.subr.mxu0 0.0
    %1247 = vmatpush1.msra.mxu0 0.0
    %1248 = vmatprep.subr.mxu0 0.0
    %1249 = vmatpush1.msra.mxu0 0.0
    %1250 = vmatprep.subr.mxu0 0.0
    %1251 = vmatpush1.msra.mxu0 0.0
    %1252 = vmatprep.subr.mxu0 0.0
    %1253 = vmatpush1.msra.mxu0 0.0
    %1254 = vmatprep.mubr.f32.mxu0 0.0
    %1255 = vmatmul.mubr.f32.gmra.mrb[0].mxu0 %v1185
    %v1256 = vpop.f32.mrb[0].mxu0
    %v1257 = vadd.f32 %v1181, %v1256
    %v1258 = vpop.f32.mrb[0].mxu0
    %1259 = vmatprep.mubr.f32.mxu0 0.0
    %1260 = vmatmul.mubr.f32.gmra.mrb[0].mxu0 %v1188
    %v1261 = vpop.f32.mrb[0].mxu0
    %v1262 = vadd.f32 %v1181, %v1261
    %v1263 = vpop.f32.mrb[0].mxu0
    %1264 = vdwg.mxu0
    %1265 = vst.msk [vmem:[#allocation12] sm:$0xff] %vm1183, %v1257
    %1266 = vst.msk [vmem:[#allocation12 + $0x8] sm:$0xff] %vm1183, %v1262
    // Predicated region
    $region45: #{tpu_custom_call.1} parent=1 // pred_check
      _
    $region46: #{tpu_custom_call.1} parent=1 // pred_check_branch
      %1268 = sbr.rel (0) target = $region48
    $region47: #{tpu_custom_call.1} parent=1 // pred_region
      %s1270 = ssub.s32 256, 256
      %1271 = vsyncadd [#allocation5], %s1270
      %s1272 = sshll.u32 [#allocation12], 4
      %s1273 = int_to_ptr.vmem [resolvable:$true] %s1272
      %1278 = dma.vmem_to_hbm [thread:$0]  %s1273, 256, %s5, [#allocation5], 128, 128, 8
    $region48: #{tpu_custom_call.1} parent=1 // pred_fallthru
      _
    // Predicated region
    $region49: #{tpu_custom_call.1} parent=1 // pred_check
      _
    $region50: #{tpu_custom_call.1} parent=1 // pred_check_branch
      %1280 = sbr.rel (0) target = $region52
    $region51: #{tpu_custom_call.1} parent=1 // pred_region
      %1281 = dma.done [#allocation5], 256
    $region52: #{tpu_custom_call.1} parent=1 // pred_fallthru
      _
    %1282 = vsyncpa [#allocation4], 1
    %1283 = vsyncpa [#allocation11], 1
    %1284 = vsyncpa [#allocation5], 1
    %1285 = vsyncpa [#allocation6], 1
    %1286 = vsyncpa [#allocation7], 1

</llo_original>
